<compile_context>
chip_gen: v7x
topology: tpu7x:2x2x1
jax: 0.10.0
libtpu: 0.0.40
codegen_flags: <defaults>
</compile_context>

<pallas_src>
import math

import jax
import jax.numpy as jnp
from jax.experimental import pallas as pl
from jax.experimental.pallas import tpu as pltpu


# ----------------------------------------------------------------------------
# Small helpers.
# ----------------------------------------------------------------------------
def _round_up(a, b):
    return (a + b - 1) // b * b


def _sublane_multiple(itemsize):
    # Sub-32-bit dtypes pack along sublanes: 16 rows for 2-byte, 32 for 1-byte.
    return {4: 8, 2: 16, 1: 32}.get(int(itemsize), 8)


def _asin_f32(z):
    """cephes asinf polynomial, f32-accurate for z in [0, 1].

    Uses only sqrt / mul / add / select, all of which lower on Mosaic.
    """
    z = z.astype(jnp.float32)
    big = z > 0.5
    zz = jnp.where(big, 0.5 * (1.0 - z), z * z)
    x = jnp.where(big, jnp.sqrt(zz), z)
    p = ((((4.2163199048e-2 * zz + 2.4181311049e-2) * zz
           + 4.5470025998e-2) * zz + 7.4953002686e-2) * zz
         + 1.6666752422e-1) * zz * x + x
    return jnp.where(big, jnp.float32(math.pi / 2.0) - 2.0 * p, p)


def _image_block_config():
    """(target block bytes per input, vmem_limit_bytes or None) per TPU gen."""
    kind = ""
    try:
        kind = jax.devices()[0].device_kind.lower()
    except Exception:
        pass
    if "v5 lite" in kind or "v5e" in kind or "v5lite" in kind:
        # v5e: the 16 MiB default scoped-VMEM is the binding constraint.
        return 2 << 20, None
    if "v7" in kind:
        # v7x: 3.2 TB/s HBM wants big blocks, but physical VMEM is only 64 MiB.
        return 6 << 20, 44 << 20
    if "v6" in kind or "trillium" in kind:
        # v6e: amortize the ~0.35us per-grid-step overhead with 8 MiB blocks.
        return 8 << 20, 64 << 20
    # Unknown generation: conservative, stays under the default scoped VMEM.
    return 2 << 20, None


# ----------------------------------------------------------------------------
# Kernel 1 (fused): pairwise spherical distances + weighted prompt losses.
#
#   x_ref  : [tile_m, D]      image embeddings tile (native dtype)
#   yt_ref : [D, T_pad]       pre-normalized target embeddings, transposed,
#                             zero-padded to 128 prompt columns (lane dense)
#   w_ref  : [1, T_pad]       prompt weights (zero in the padded columns)
#   s_ref  : [n_pad, tile_m]  selection/averaging matrix (1/cuts, row mask)
#   dists_ref: [tile_m, T_pad]  spherical distances (optional output tile)
#   ploss_ref: [n_pad, 1]       prompt losses (written on the last step)
#   acc_ref : [n_pad, T_pad]    VMEM accumulator
#
# Matches: F.normalize; (x-y).norm(-1).div(2).arcsin().pow(2).mul(2)
#          then dists.view(cuts, n, T).mul(w).sum(2).mean(0)
# ----------------------------------------------------------------------------
def _make_dist_prompt_kernel(return_dists):
    # NOTE: Mosaic's dot lowering only exposes DEFAULT / HIGHEST; HIGH (bf16_3x)
    # is not expressible, and DEFAULT would break the 2-2<xn,yn> cancellation,
    # so HIGHEST is kept on both matmuls (they also carry exact reductions).
    prec = jax.lax.Precision.HIGHEST

    def compute(x_ref, yt_ref, w_ref, s_ref, dists_ref, ploss_ref, acc_ref):
        i = pl.program_id(0)

        @pl.when(i == 0)
        def _():
            acc_ref[...] = jnp.zeros_like(acc_ref)

        x = x_ref[...].astype(jnp.float32)                     # [tile_m, D]
        # F.normalize(dim=-1): x / max(||x||, 1e-12). Normalization is deferred
        # past the matmul: scale the [tile_m, T_pad] result instead of the
        # [tile_m, D] operand (rsqrt runs on the EUP slot).
        inv_norm = jax.lax.rsqrt(
            jnp.maximum(jnp.sum(x * x, axis=-1, keepdims=True), 1e-24))
        dot = jnp.dot(x, yt_ref[...], preferred_element_type=jnp.float32,
                      precision=prec) * inv_norm               # [tile_m, T_pad]

        # ||xn - yn||^2 = 2 - 2 <xn, yn>
        nrm = jnp.sqrt(jnp.maximum(2.0 - 2.0 * dot, 0.0))
        z = jnp.clip(0.5 * nrm, 0.0, 1.0)                      # guard fp drift
        d = 2.0 * jnp.square(_asin_f32(z))                     # [tile_m, T_pad]
        if dists_ref is not None:
            dists_ref[...] = d                                 # lane-dense store

        # Fused prompt loss on the otherwise-idle MXU:
        #   acc[img, t] += sum_m S[img, m] * d[m, t] * w[t]
        dw = d * w_ref[...]                                    # [tile_m, T_pad]
        acc_ref[...] += jnp.dot(s_ref[...], dw,
                                preferred_element_type=jnp.float32,
                                precision=prec)                # [n_pad, T_pad]

        @pl.when(i == pl.num_programs(0) - 1)
        def _():
            # Single lane reduce in the finalize (padded columns are zero).
            ploss_ref[...] = jnp.sum(acc_ref[...], axis=1, keepdims=True)

    if return_dists:
        def kernel(x_ref, yt_ref, w_ref, s_ref, dists_ref, ploss_ref, acc_ref):
            compute(x_ref, yt_ref, w_ref, s_ref, dists_ref, ploss_ref, acc_ref)
    else:
        def kernel(x_ref, yt_ref, w_ref, s_ref, ploss_ref, acc_ref):
            compute(x_ref, yt_ref, w_ref, s_ref, None, ploss_ref, acc_ref)
    return kernel


def spherical_and_prompt_losses_pallas(image_embeds, target_embeds, weights,
                                       n_batch, *, return_dists=True,
                                       max_tile_m=512):
    """image_embeds [M, D], target_embeds [T, D], weights [T]
    -> (dists [M, T] f32 or None, prompt_losses [n_batch] f32)."""
    M, D = image_embeds.shape
    T, D2 = target_embeds.shape
    assert D == D2
    assert M % n_batch == 0, "image embeds must be cuts * n rows"
    cuts = M // n_batch

    # Normalize the (tiny) target embeddings once; present them as [D, T_pad]
    # (T zero-padded to a 128 multiple) so the kernel contraction is a
    # canonical lane-dense MXU matmul and the dists store is unmasked.
    T_pad = _round_up(T, 128)
    y32 = target_embeds.astype(jnp.float32)
    yn = y32 / jnp.maximum(
        jnp.sqrt(jnp.sum(y32 * y32, axis=-1, keepdims=True)), 1e-12)
    yt = jnp.zeros((D, T_pad), jnp.float32).at[:, :T].set(yn.T)
    w_row = jnp.zeros((1, T_pad), jnp.float32).at[0, :T].set(
        weights.astype(jnp.float32))

    # M tiling: whole M (dtype-aware sublane rounding) when it fits, else
    # 128-aligned tiles with zero padding.  Padded rows are masked out via S.
    sub = _sublane_multiple(jnp.dtype(image_embeds.dtype).itemsize)
    if M <= max_tile_m:
        tile_m = _round_up(M, sub)
    else:
        tile_m = max(128, max_tile_m // 128 * 128)
    m_pad = _round_up(M, tile_m)
    x = image_embeds
    if m_pad != M:
        x = jnp.pad(x, ((0, m_pad - M), (0, 0)))

    # Precomputed selection/averaging matrix (replaces the in-kernel one-hot):
    # S[img, m] = 1/cuts if (m < M and m % n == img) else 0.  Row order of the
    # embeddings is cut*n + img, matching dists.view(cuts, n, T).
    n_pad = _round_up(n_batch, 8)
    rows = jnp.arange(m_pad)
    sel = (rows[None, :] % n_batch == jnp.arange(n_pad)[:, None]) \
        & (rows[None, :] < M)
    s_mat = sel.astype(jnp.float32) / float(cuts)

    grid = (m_pad // tile_m,)
    in_specs = [pl.BlockSpec((tile_m, D), lambda i: (i, 0)),
                pl.BlockSpec((D, T_pad), lambda i: (0, 0)),
                pl.BlockSpec((1, T_pad), lambda i: (0, 0)),
                pl.BlockSpec((n_pad, tile_m), lambda i: (0, i))]
    ploss_spec = pl.BlockSpec((n_pad, 1), lambda i: (0, 0))
    scratch = [pltpu.VMEM((n_pad, T_pad), jnp.float32)]
    # ploss accumulates across the M axis -> reduction axis, "arbitrary".
    # TODO(synk): for very large cuts*n on v7x, an un-fused variant with a
    # "parallel" M axis (reduction in the wrapper) uses both TensorCores.
    cparams = pltpu.CompilerParams(dimension_semantics=("arbitrary",))

    if return_dists:
        dists_pad, ploss = pl.pallas_call(
            _make_dist_prompt_kernel(True),
            out_shape=(jax.ShapeDtypeStruct((m_pad, T_pad), jnp.float32),
                       jax.ShapeDtypeStruct((n_pad, 1), jnp.float32)),
            grid=grid,
            in_specs=in_specs,
            out_specs=(pl.BlockSpec((tile_m, T_pad), lambda i: (i, 0)),
                       ploss_spec),
            scratch_shapes=scratch,
            compiler_params=cparams,
        )(x, yt, w_row, s_mat)
        return dists_pad[:M, :T], ploss[:n_batch, 0]

    ploss = pl.pallas_call(
        _make_dist_prompt_kernel(False),
        out_shape=jax.ShapeDtypeStruct((n_pad, 1), jnp.float32),
        grid=grid,
        in_specs=in_specs,
        out_specs=ploss_spec,
        scratch_shapes=scratch,
        compiler_params=cparams,
    )(x, yt, w_row, s_mat)
    return None, ploss[:n_batch, 0]


# ----------------------------------------------------------------------------
# Kernel 2: range loss (per image) + saturation loss, streamed over the
# flattened feature axis in lane/sublane-dense (rows_block, 128) blocks.
#   range_loss(x) = mean over (C,H,W) of (x - clamp(x,-1,1))^2
#   sat partial   = per-image sum of |x_in - clamp(x_in,-1,1)|  (mean in wrapper)
# ----------------------------------------------------------------------------
def _make_image_losses_kernel(f_true, with_sat, rows_block):
    inv_f = float(1.0 / f_true)
    g = rows_block // 8

    def _accum(acc_ref, vals):
        # vals: [rows_block, 128] f32.  Grouping by 8 sublanes keeps the
        # steady state pure vadds into the (8,128) accumulator (no XLU).
        if g == 1:
            acc_ref[...] += vals
        else:
            acc_ref[...] += jnp.sum(vals.reshape(g, 8, 128), axis=0)

    def _finalize_sum(acc_ref):
        # Single cross-sublane + cross-lane reduce, only in the finalize.
        return jnp.sum(jnp.sum(acc_ref[...], axis=0, keepdims=True),
                       axis=1, keepdims=True)                  # (1, 1)

    if with_sat:
        def kernel(pred_ref, xin_ref, range_ref, sat_ref, racc, sacc):
            j = pl.program_id(1)

            @pl.when(j == 0)
            def _():
                racc[...] = jnp.zeros_like(racc)
                sacc[...] = jnp.zeros_like(sacc)

            pred = pred_ref[...].astype(jnp.float32)           # widen in-reg
            pd = pred - jnp.clip(pred, -1.0, 1.0)
            _accum(racc, pd * pd)

            xin = xin_ref[...].astype(jnp.float32)
            _accum(sacc, jnp.abs(xin - jnp.clip(xin, -1.0, 1.0)))

            @pl.when(j == pl.num_programs(1) - 1)
            def _():
                range_ref[...] = _finalize_sum(racc) * inv_f
                sat_ref[...] = _finalize_sum(sacc)     # raw sum; mean in wrapper
        return kernel

    def kernel(pred_ref, range_ref, racc):
        j = pl.program_id(1)

        @pl.when(j == 0)
        def _():
            racc[...] = jnp.zeros_like(racc)

        pred = pred_ref[...].astype(jnp.float32)
        pd = pred - jnp.clip(pred, -1.0, 1.0)
        _accum(racc, pd * pd)

        @pl.when(j == pl.num_programs(1) - 1)
        def _():
            range_ref[...] = _finalize_sum(racc) * inv_f
    return kernel


def _image_losses_pallas(pred_nchw, xin_nchw=None, *,
                         target_block_bytes=None, vmem_limit_bytes=None):
    """pred [N,C,H,W] (+ optional x_in) -> (range_losses [N], sat_loss scalar)
    or just range_losses [N] when x_in is None.  Inputs stay in their native
    dtype in HBM; widening to f32 happens in-register."""
    N = pred_nchw.shape[0]
    F = int(math.prod(pred_nchw.shape[1:]))
    with_sat = xin_nchw is not None

    ins = [pred_nchw.reshape(N, F)]
    if with_sat:
        ins.append(xin_nchw.reshape(N, F))

    if target_block_bytes is None:
        target_block_bytes, auto_vmem = _image_block_config()
        if vmem_limit_bytes is None:
            vmem_limit_bytes = auto_vmem

    # Lane/sublane-dense layout: (N, rows, 128) with rows_block sublanes per
    # block.  Block size is chosen from bytes (resolution independent); the
    # feature axis is simply zero-padded up to a block multiple (zeros
    # contribute 0 to both sums).
    itemsize = max(jnp.dtype(a.dtype).itemsize for a in ins)
    sub = max(8, _sublane_multiple(itemsize))
    R = (F + 127) // 128
    R_sub = _round_up(R, sub)
    rows_cap = max(sub, target_block_bytes // (128 * itemsize))
    desired = max(32, rows_cap // 32 * 32)
    if R_sub <= desired:
        rows_block, R_pad = R_sub, R_sub
    else:
        rows_block = desired
        R_pad = _round_up(R_sub, rows_block)
    F_tot = R_pad * 128
    if F_tot != F:
        ins = [jnp.pad(a, ((0, 0), (0, F_tot - F))) for a in ins]
    ins = [a.reshape(N, R_pad, 128) for a in ins]
    grid = (N, R_pad // rows_block)

    blk = (pl.Squeezed(), rows_block, 128)
    in_specs = [pl.BlockSpec(blk, lambda i, j: (i, j, 0)) for _ in ins]
    out_spec = pl.BlockSpec((pl.Squeezed(), 1, 1), lambda i, j: (i, 0, 0))
    kernel = _make_image_losses_kernel(F, with_sat, rows_block)

    cp_kwargs = dict(dimension_semantics=("parallel", "arbitrary"))
    if vmem_limit_bytes:
        cp_kwargs["vmem_limit_bytes"] = int(vmem_limit_bytes)
    cparams = pltpu.CompilerParams(**cp_kwargs)

    if with_sat:
        range_out, sat_out = pl.pallas_call(
            kernel,
            out_shape=(jax.ShapeDtypeStruct((N, 1, 1), jnp.float32),
                       jax.ShapeDtypeStruct((N, 1, 1), jnp.float32)),
            grid=grid,
            in_specs=in_specs,
            out_specs=(out_spec, out_spec),
            scratch_shapes=[pltpu.VMEM((8, 128), jnp.float32),
                            pltpu.VMEM((8, 128), jnp.float32)],
            compiler_params=cparams,
        )(*ins)
        sat_loss = jnp.sum(sat_out) / float(N * F)
        return range_out[:, 0, 0], sat_loss

    range_out = pl.pallas_call(
        kernel,
        out_shape=jax.ShapeDtypeStruct((N, 1, 1), jnp.float32),
        grid=grid,
        in_specs=in_specs,
        out_specs=out_spec,
        scratch_shapes=[pltpu.VMEM((8, 128), jnp.float32)],
        compiler_params=cparams,
    )(*ins)
    return range_out[:, 0, 0]


def image_range_sat_losses_pallas(pred_original_sample, x_in, **kwargs):
    return _image_losses_pallas(pred_original_sample, x_in, **kwargs)


def range_loss_pallas(pred_original_sample, **kwargs):
    return _image_losses_pallas(pred_original_sample, None, **kwargs)


# ----------------------------------------------------------------------------
# Guider wrapper (mirrors ImageTextGuider's guidance losses).
# ----------------------------------------------------------------------------
class ImageTextGuiderPallas:
    """JAX/Pallas stand-in for mmagic ImageTextGuider's guidance math.

    The CLIP models / LPIPS nets / cutout augmentations are external networks
    and have no Pallas equivalent here; deterministic synthetic embeddings
    stand in for their outputs.
    """
    # TODO(synk): CLIP text/image encoders, MakeCutoutsDango (torchvision
    # augmentations), LPIPS, tv_loss and torch.autograd gradient extraction in
    # cond_fn are not translatable to a single Pallas kernel and are not faked.

    def __init__(self, clip_guidance_scale=5000.0, range_scale=150.0,
                 sat_scale=0.0, tv_scale=0.0):
        self.clip_guidance_scale = clip_guidance_scale
        self.range_scale = range_scale
        self.sat_scale = sat_scale
        self.tv_scale = tv_scale

    def spherical_dist_loss(self, image_embeds, target_embeds):
        T = target_embeds.shape[0]
        dists, _ = spherical_and_prompt_losses_pallas(
            image_embeds, target_embeds, jnp.ones((T,), jnp.float32), 1,
            return_dists=True)
        return dists

    def range_loss(self, pred_original_sample):
        # Range-only kernel: reads only pred, no sat computation.
        return range_loss_pallas(pred_original_sample)

    def guidance_losses(self, x_in, pred_original_sample, image_embeds,
                        target_embeds, weights, return_dists=False):
        n = x_in.shape[0]
        dists, losses = spherical_and_prompt_losses_pallas(
            image_embeds, target_embeds, weights, n, return_dists=return_dists)
        range_losses, sat_loss = image_range_sat_losses_pallas(
            pred_original_sample, x_in)
        total = (jnp.sum(losses) * self.clip_guidance_scale
                 + jnp.sum(range_losses) * self.range_scale
                 + sat_loss * self.sat_scale)
        out = {
            "prompt_losses": losses,
            "range_losses": range_losses,
            "sat_loss": sat_loss,
            "total_loss": total,
        }
        if return_dists:
            out["dists"] = dists
        return out

    def __call__(self, x):
        # Matches the PyTorch module's forward().
        raise NotImplementedError("No forward function for disco guider")


# ----------------------------------------------------------------------------
# Demo / self-check.
# ----------------------------------------------------------------------------
if __name__ == "__main__":
    key = jax.random.PRNGKey(0)
    n, C, H, W = 2, 3, 32, 32       # batch of diffusion images (NCHW semantics)
    D = 128                         # CLIP embedding dim (small synthetic)
    n_cuts = 8                      # Overview + InnerCrop cutouts per image
    T = 4                           # number of text prompt embeddings

    k1, k2, k3, k4, k5 = jax.random.split(key, 5)
    x_in = 1.5 * jax.random.normal(k1, (n, C, H, W), jnp.float32)
    pred = 1.5 * jax.random.normal(k2, (n, C, H, W), jnp.float32)
    # Synthetic stand-ins for CLIP image/text embeddings (deterministic).
    image_embeds = jax.random.normal(k3, (n_cuts * n, D), jnp.float32)
    target_embeds = jax.random.normal(k4, (T, D), jnp.float32)
    raw_w = jnp.abs(jax.random.normal(k5, (T,), jnp.float32)) + 0.1
    weights = raw_w / jnp.abs(jnp.sum(raw_w))   # as in compute_prompt_stats

    guider = ImageTextGuiderPallas()
    out = guider.guidance_losses(x_in, pred, image_embeds, target_embeds,
                                 weights, return_dists=True)
    out = jax.block_until_ready(out)
    out_fast = jax.block_until_ready(
        guider.guidance_losses(x_in, pred, image_embeds, target_embeds,
                               weights))            # no-dists fast path
    range_only = jax.block_until_ready(guider.range_loss(pred))

    # ---- pure-JAX reference check ------------------------------------------
    def _normalize(v):
        return v / jnp.maximum(
            jnp.sqrt(jnp.sum(v * v, axis=-1, keepdims=True)), 1e-12)

    xe, ye = _normalize(image_embeds), _normalize(target_embeds)
    dref = jnp.sqrt(jnp.sum((xe[:, None, :] - ye[None, :, :]) ** 2, axis=-1))
    dists_ref = 2.0 * jnp.arcsin(dref / 2.0) ** 2
    losses_ref = jnp.mean(
        jnp.sum(dists_ref.reshape(n_cuts, n, T) * weights, axis=2), axis=0)
    range_ref = jnp.mean((pred - jnp.clip(pred, -1, 1)) ** 2, axis=(1, 2, 3))
    sat_ref = jnp.mean(jnp.abs(x_in - jnp.clip(x_in, -1, 1)))

    assert jnp.allclose(out["dists"], dists_ref, atol=1e-5, rtol=1e-5)
    assert jnp.allclose(out["prompt_losses"], losses_ref, atol=1e-5, rtol=1e-5)
    assert jnp.allclose(out_fast["prompt_losses"], losses_ref,
                        atol=1e-5, rtol=1e-5)
    assert jnp.allclose(out["range_losses"], range_ref, atol=1e-5, rtol=1e-5)
    assert jnp.allclose(out["sat_loss"], sat_ref, atol=1e-5, rtol=1e-5)
    assert jnp.allclose(range_only, range_ref, atol=1e-5, rtol=1e-5)

    # ---- extra coverage: multi-tile M path (padded rows + accumulation) -----
    k6, k7, k8 = jax.random.split(k5, 3)
    M2, cuts2 = 160, 80
    ie2 = jax.random.normal(k6, (M2, D), jnp.float32)
    d2, pl2 = spherical_and_prompt_losses_pallas(
        ie2, target_embeds, weights, 2, return_dists=True, max_tile_m=128)
    d2, pl2 = jax.block_until_ready((d2, pl2))
    xe2 = _normalize(ie2)
    dref2 = 2.0 * jnp.arcsin(
        jnp.sqrt(jnp.sum((xe2[:, None, :] - ye[None, :, :]) ** 2, -1)) / 2.0) ** 2
    pl_ref2 = jnp.mean(
        jnp.sum(dref2.reshape(cuts2, 2, T) * weights, axis=2), axis=0)
    assert jnp.allclose(d2, dref2, atol=1e-5, rtol=1e-5)
    assert jnp.allclose(pl2, pl_ref2, atol=1e-5, rtol=1e-5)

    # ---- extra coverage: multi-block feature streaming path ------------------
    x3 = 1.5 * jax.random.normal(k7, (2, 3, 64, 64), jnp.float32)
    p3 = 1.5 * jax.random.normal(k8, (2, 3, 64, 64), jnp.float32)
    r3, s3 = jax.block_until_ready(
        _image_losses_pallas(p3, x3, target_block_bytes=16 << 10))
    r3_ref = jnp.mean((p3 - jnp.clip(p3, -1, 1)) ** 2, axis=(1, 2, 3))
    s3_ref = jnp.mean(jnp.abs(x3 - jnp.clip(x3, -1, 1)))
    assert jnp.allclose(r3, r3_ref, atol=1e-5, rtol=1e-5)
    assert jnp.allclose(s3, s3_ref, atol=1e-5, rtol=1e-5)

    print("KERNEL_OK")
</pallas_src>

<mosaic_0001>
module attributes {stable_mosaic.version = 11 : i64} {
  func.func @kernel(%arg0: i32, %arg1: memref<16x128xf32, #tpu.memory_space<vmem>>, %arg2: memref<128x128xf32, #tpu.memory_space<vmem>>, %arg3: memref<1x128xf32, #tpu.memory_space<vmem>>, %arg4: memref<8x16xf32, #tpu.memory_space<vmem>>, %arg5: memref<16x128xf32, #tpu.memory_space<vmem>>, %arg6: memref<8x1xf32, #tpu.memory_space<vmem>>, %arg7: memref<8x128xf32, #tpu.memory_space<vmem>>) attributes {dimension_semantics = [#tpu.dimension_semantics<arbitrary>], iteration_bounds = array<i64: 1>, scalar_prefetch = 0 : i64, scratch_operands = 1 : i64, tpu.core_type = #tpu.core_type<tc>, window_params = [{transform_indices = @transform_0, window_bounds = array<i64: 16, 128>}, {pipeline_mode = #tpu.pipeline_mode<synchronous>, transform_indices = @transform_1, window_bounds = array<i64: 128, 128>}, {pipeline_mode = #tpu.pipeline_mode<synchronous>, transform_indices = @transform_2, window_bounds = array<i64: 1, 128>}, {transform_indices = @transform_3, window_bounds = array<i64: 8, 16>}, {transform_indices = @transform_4, window_bounds = array<i64: 16, 128>}, {pipeline_mode = #tpu.pipeline_mode<synchronous>, transform_indices = @transform_5, window_bounds = array<i64: 8, 1>}]} {
    %c0_i32 = arith.constant 0 : i32
    %0 = arith.cmpi eq, %arg0, %c0_i32 : i32
    %1 = arith.extui %0 : i1 to i32
    %c0_i32_0 = arith.constant 0 : i32
    %2 = arith.cmpi ne, %1, %c0_i32_0 : i32
    scf.if %2 {
      %cst_36 = arith.constant 0.000000e+00 : f32
      %73 = vector.broadcast %cst_36 : f32 to vector<8x128xf32>
      %c0_37 = arith.constant 0 : index
      %c0_38 = arith.constant 0 : index
      %74 = vector.load %arg7[%c0_37, %c0_38] : memref<8x128xf32, #tpu.memory_space<vmem>>, vector<8x128xf32>
      tpu.vector_store %arg7[%c0_37, %c0_38], %73 {strides = array<i32>} : memref<8x128xf32, #tpu.memory_space<vmem>>, vector<8x128xf32>,
    } else {
    }
    %c0 = arith.constant 0 : index
    %c0_1 = arith.constant 0 : index
    %3 = vector.load %arg1[%c0, %c0_1] : memref<16x128xf32, #tpu.memory_space<vmem>>, vector<16x128xf32>
    %4 = arith.mulf %3, %3 : vector<16x128xf32>
    %cst = arith.constant dense<0.000000e+00> : vector<16xf32>
    %5 = vector.multi_reduction <add>, %4, %cst [1] : vector<16x128xf32> to vector<16xf32>
    %6 = vector.shape_cast %5 : vector<16xf32> to vector<16x1xf32>
    %cst_2 = arith.constant 1.000000e-24 : f32
    %7 = vector.broadcast %cst_2 : f32 to vector<16x1xf32>
    %8 = arith.maximumf %6, %7 : vector<16x1xf32>
    %9 = math.rsqrt %8 : vector<16x1xf32>
    %c0_3 = arith.constant 0 : index
    %c0_4 = arith.constant 0 : index
    %10 = vector.load %arg2[%c0_3, %c0_4] : memref<128x128xf32, #tpu.memory_space<vmem>>, vector<128x128xf32>
    %cst_5 = arith.constant dense<0.000000e+00> : vector<16x128xf32>
    %11 = tpu.matmul %3, %10, %cst_5 {dimension_numbers = #tpu.dot_dimension_numbers<[1], [0], [0], [1], [0, 0, 1, 1], [], []>, precision = #tpu.contract_precision<fp32>} : vector<16x128xf32>, vector<128x128xf32>, vector<16x128xf32> -> vector<16x128xf32>
    %12 = vector.broadcast %9 : vector<16x1xf32> to vector<16x128xf32>
    %13 = arith.mulf %11, %12 : vector<16x128xf32>
    %cst_6 = arith.constant 2.000000e+00 : f32
    %14 = vector.broadcast %cst_6 : f32 to vector<16x128xf32>
    %15 = arith.mulf %14, %13 : vector<16x128xf32>
    %cst_7 = arith.constant 2.000000e+00 : f32
    %16 = vector.broadcast %cst_7 : f32 to vector<16x128xf32>
    %17 = arith.subf %16, %15 : vector<16x128xf32>
    %cst_8 = arith.constant 0.000000e+00 : f32
    %18 = vector.broadcast %cst_8 : f32 to vector<16x128xf32>
    %19 = arith.maximumf %17, %18 : vector<16x128xf32>
    %20 = math.sqrt %19 : vector<16x128xf32>
    %cst_9 = arith.constant 5.000000e-01 : f32
    %21 = vector.broadcast %cst_9 : f32 to vector<16x128xf32>
    %22 = arith.mulf %21, %20 : vector<16x128xf32>
    %cst_10 = arith.constant 0.000000e+00 : f32
    %cst_11 = arith.constant 1.000000e+00 : f32
    %23 = vector.broadcast %cst_10 : f32 to vector<16x128xf32>
    %24 = arith.maximumf %23, %22 : vector<16x128xf32>
    %25 = vector.broadcast %cst_11 : f32 to vector<16x128xf32>
    %26 = arith.minimumf %25, %24 : vector<16x128xf32>
    %cst_12 = arith.constant 5.000000e-01 : f32
    %27 = vector.broadcast %cst_12 : f32 to vector<16x128xf32>
    %28 = arith.cmpf ogt, %26, %27 : vector<16x128xf32>
    %cst_13 = arith.constant 1.000000e+00 : f32
    %29 = vector.broadcast %cst_13 : f32 to vector<16x128xf32>
    %30 = arith.subf %29, %26 : vector<16x128xf32>
    %cst_14 = arith.constant 5.000000e-01 : f32
    %31 = vector.broadcast %cst_14 : f32 to vector<16x128xf32>
    %32 = arith.mulf %31, %30 : vector<16x128xf32>
    %33 = arith.mulf %26, %26 : vector<16x128xf32>
    %34 = arith.select %28, %32, %33 : vector<16x128xi1>, vector<16x128xf32>
    %35 = math.sqrt %34 : vector<16x128xf32>
    %36 = arith.select %28, %35, %26 : vector<16x128xi1>, vector<16x128xf32>
    %cst_15 = arith.constant 4.216320e-02 : f32
    %37 = vector.broadcast %cst_15 : f32 to vector<16x128xf32>
    %38 = arith.mulf %37, %34 : vector<16x128xf32>
    %cst_16 = arith.constant 0.024181312 : f32
    %39 = vector.broadcast %cst_16 : f32 to vector<16x128xf32>
    %40 = arith.addf %38, %39 : vector<16x128xf32>
    %41 = arith.mulf %40, %34 : vector<16x128xf32>
    %cst_17 = arith.constant 0.0454700254 : f32
    %42 = vector.broadcast %cst_17 : f32 to vector<16x128xf32>
    %43 = arith.addf %41, %42 : vector<16x128xf32>
    %44 = arith.mulf %43, %34 : vector<16x128xf32>
    %cst_18 = arith.constant 0.0749530047 : f32
    %45 = vector.broadcast %cst_18 : f32 to vector<16x128xf32>
    %46 = arith.addf %44, %45 : vector<16x128xf32>
    %47 = arith.mulf %46, %34 : vector<16x128xf32>
    %cst_19 = arith.constant 0.166667521 : f32
    %48 = vector.broadcast %cst_19 : f32 to vector<16x128xf32>
    %49 = arith.addf %47, %48 : vector<16x128xf32>
    %50 = arith.mulf %49, %34 : vector<16x128xf32>
    %51 = arith.mulf %50, %36 : vector<16x128xf32>
    %52 = arith.addf %51, %36 : vector<16x128xf32>
    %cst_20 = arith.constant 2.000000e+00 : f32
    %53 = vector.broadcast %cst_20 : f32 to vector<16x128xf32>
    %54 = arith.mulf %53, %52 : vector<16x128xf32>
    %cst_21 = arith.constant 1.57079637 : f32
    %55 = vector.broadcast %cst_21 : f32 to vector<16x128xf32>
    %56 = arith.subf %55, %54 : vector<16x128xf32>
    %57 = arith.select %28, %56, %52 : vector<16x128xi1>, vector<16x128xf32>
    %58 = arith.mulf %57, %57 : vector<16x128xf32>
    %cst_22 = arith.constant 2.000000e+00 : f32
    %59 = vector.broadcast %cst_22 : f32 to vector<16x128xf32>
    %60 = arith.mulf %59, %58 : vector<16x128xf32>
    %c0_23 = arith.constant 0 : index
    %c0_24 = arith.constant 0 : index
    %61 = vector.load %arg5[%c0_23, %c0_24] : memref<16x128xf32, #tpu.memory_space<vmem>>, vector<16x128xf32>
    tpu.vector_store %arg5[%c0_23, %c0_24], %60 {strides = array<i32>} : memref<16x128xf32, #tpu.memory_space<vmem>>, vector<16x128xf32>,
    %c0_25 = arith.constant 0 : index
    %c0_26 = arith.constant 0 : index
    %62 = vector.load %arg3[%c0_25, %c0_26] : memref<1x128xf32, #tpu.memory_space<vmem>>, vector<1x128xf32>
    %63 = vector.broadcast %62 : vector<1x128xf32> to vector<16x128xf32>
    %64 = arith.mulf %60, %63 : vector<16x128xf32>
    %c0_27 = arith.constant 0 : index
    %c0_28 = arith.constant 0 : index
    %65 = vector.load %arg7[%c0_27, %c0_28] : memref<8x128xf32, #tpu.memory_space<vmem>>, vector<8x128xf32>
    %c0_29 = arith.constant 0 : index
    %c0_30 = arith.constant 0 : index
    %66 = vector.load %arg4[%c0_29, %c0_30] : memref<8x16xf32, #tpu.memory_space<vmem>>, vector<8x16xf32>
    %cst_31 = arith.constant dense<0.000000e+00> : vector<8x128xf32>
    %67 = tpu.matmul %66, %64, %cst_31 {dimension_numbers = #tpu.dot_dimension_numbers<[1], [0], [0], [1], [0, 0, 1, 1], [], []>, precision = #tpu.contract_precision<fp32>} : vector<8x16xf32>, vector<16x128xf32>, vector<8x128xf32> -> vector<8x128xf32>
    %68 = arith.addf %65, %67 : vector<8x128xf32>
    %c0_32 = arith.constant 0 : index
    %c0_33 = arith.constant 0 : index
    %69 = vector.load %arg7[%c0_32, %c0_33] : memref<8x128xf32, #tpu.memory_space<vmem>>, vector<8x128xf32>
    tpu.vector_store %arg7[%c0_32, %c0_33], %68 {strides = array<i32>} : memref<8x128xf32, #tpu.memory_space<vmem>>, vector<8x128xf32>,
    %c0_i32_34 = arith.constant 0 : i32
    %70 = arith.cmpi eq, %arg0, %c0_i32_34 : i32
    %71 = arith.extui %70 : i1 to i32
    %c0_i32_35 = arith.constant 0 : i32
    %72 = arith.cmpi ne, %71, %c0_i32_35 : i32
    scf.if %72 {
      %c0_36 = arith.constant 0 : index
      %c0_37 = arith.constant 0 : index
      %73 = vector.load %arg7[%c0_36, %c0_37] : memref<8x128xf32, #tpu.memory_space<vmem>>, vector<8x128xf32>
      %cst_38 = arith.constant dense<0.000000e+00> : vector<8xf32>
      %74 = vector.multi_reduction <add>, %73, %cst_38 [1] : vector<8x128xf32> to vector<8xf32>
      %75 = vector.shape_cast %74 : vector<8xf32> to vector<8x1xf32>
      %c0_39 = arith.constant 0 : index
      %c0_40 = arith.constant 0 : index
      %76 = vector.load %arg6[%c0_39, %c0_40] : memref<8x1xf32, #tpu.memory_space<vmem>>, vector<8x1xf32>
      tpu.vector_store %arg6[%c0_39, %c0_40], %75 {strides = array<i32>} : memref<8x1xf32, #tpu.memory_space<vmem>>, vector<8x1xf32>,
    } else {
    }
    return
  }
  func.func @transform_0(%arg0: i32) -> (i32, i32) {
    %c0_i32 = arith.constant 0 : i32
    %c0_i32_0 = arith.constant 0 : i32
    return %arg0, %c0_i32 : i32, i32
  }
  func.func @transform_1(%arg0: i32) -> (i32, i32) {
    %c0_i32 = arith.constant 0 : i32
    %c0_i32_0 = arith.constant 0 : i32
    %c0_i32_1 = arith.constant 0 : i32
    return %c0_i32, %c0_i32_0 : i32, i32
  }
  func.func @transform_2(%arg0: i32) -> (i32, i32) {
    %c0_i32 = arith.constant 0 : i32
    %c0_i32_0 = arith.constant 0 : i32
    %c0_i32_1 = arith.constant 0 : i32
    return %c0_i32, %c0_i32_0 : i32, i32
  }
  func.func @transform_3(%arg0: i32) -> (i32, i32) {
    %c0_i32 = arith.constant 0 : i32
    %c0_i32_0 = arith.constant 0 : i32
    return %c0_i32, %arg0 : i32, i32
  }
  func.func @transform_4(%arg0: i32) -> (i32, i32) {
    %c0_i32 = arith.constant 0 : i32
    %c0_i32_0 = arith.constant 0 : i32
    return %arg0, %c0_i32 : i32, i32
  }
  func.func @transform_5(%arg0: i32) -> (i32, i32) {
    %c0_i32 = arith.constant 0 : i32
    %c0_i32_0 = arith.constant 0 : i32
    %c0_i32_1 = arith.constant 0 : i32
    return %c0_i32, %c0_i32_0 : i32, i32
  }
}

</mosaic_0001>

<llo_original>
// kernel: tpu_custom_call.1
$region0: #{tpu_custom_call.1}
  #allocation0 [shape = 'u32[]', space=smem, size = 0x4, offset = 0x4, fixed_abs, tag = 'smem constant byte address 0x4 - core index']
  #allocation1 [shape = 'u32[144,128]{1,0:T(1,128)}', space=vmem, size = 0x12000, scoped, tag = 'internal scratch']
  #allocation2 [shape = 'f32[8,128]{1,0:T(8,128)}', space=vmem, size = 0x1000, scoped, tag = 'scratch operand']
  %s0 = inlined_call_operand.hbm [shape: f32[16,128], index: 0, kind: input, shape index: {}]
  %s1 = inlined_call_operand.hbm [shape: f32[128,128], index: 1, kind: input, shape index: {}]
  %s2 = inlined_call_operand.vmem [shape: f32[1,128], index: 2, kind: input, shape index: {}]
  %s3 = inlined_call_operand.vmem [shape: f32[8,16], index: 3, kind: input, shape index: {}]
  %s4 = inlined_call_operand.hbm [shape: f32[16,128], index: 4, kind: output, shape index: {0}]
  %s5 = inlined_call_operand.vmem [shape: f32[8,1], index: 5, kind: output, shape index: {1}]
  %6 = xla_tuple %s4, %s5
  %s7 = sld [smem:[#allocation0]]
  $region50: #{tpu_custom_call.1} parent=0
    _
  %s9 = ssub.s32 1, %s7
  %s10 = scalar_select 0, %s9, %s7
  $region1: #{tpu_custom_call.1} parent=0
    #allocation3 [shape = 'u8[8192]{0}', space=vmem, size = 0x2000, scoped, tag = 'input window, operand 0, single buffered']
    #allocation4 [shape = 's32[1]{0}', space=sflag, size = 0x4, scoped, tag = 'scoped memory for tpu_custom_call.1']
    #allocation5 [shape = 's32[1]{0}', space=sflag, size = 0x4, scoped, tag = 'scoped memory for tpu_custom_call.1']
    #allocation6 [shape = 'u8[65536]{0}', space=vmem, size = 0x10000, scoped, tag = 'input window, operand 1, single buffered']
    #allocation7 [shape = 's32[1]{0}', space=sflag, size = 0x4, scoped, tag = 'scoped memory for tpu_custom_call.1']
    #allocation8 [shape = 'u8[8192]{0}', space=vmem, size = 0x2000, scoped, tag = 'output window, operand 0, single buffered']
    %11 = vsyncpa [#allocation4], 0
    %12 = vsyncpa [#allocation7], 0
    %13 = vsyncpa [#allocation5], 0
    // Predicated region
    $region2: #{tpu_custom_call.1} parent=1 // pred_check
      _
    $region3: #{tpu_custom_call.1} parent=1 // pred_check_branch
      %15 = sbr.rel (0) target = $region5
    $region4: #{tpu_custom_call.1} parent=1 // pred_region
      %s17 = ssub.s32 256, 256
      %18 = vsyncadd [#allocation4], %s17
      %s19 = sshll.u32 [#allocation3], 4
      %s20 = int_to_ptr.vmem [resolvable:$true] %s19
      %25 = dma.hbm_to_vmem [thread:$0]  %s0, 256, %s20, [#allocation4], 128, 128, 8
    $region5: #{tpu_custom_call.1} parent=1 // pred_fallthru
      _
    // Predicated region
    $region6: #{tpu_custom_call.1} parent=1 // pred_check
      _
    $region7: #{tpu_custom_call.1} parent=1 // pred_check_branch
      %27 = sbr.rel (0) target = $region9
    $region8: #{tpu_custom_call.1} parent=1 // pred_region
      %s29 = ssub.s32 2048, 2048
      %30 = vsyncadd [#allocation7], %s29
      %s31 = sshll.u32 [#allocation6], 4
      %s32 = int_to_ptr.vmem [resolvable:$true] %s31
      %37 = dma.hbm_to_vmem [thread:$0]  %s1, 2048, %s32, [#allocation7], 128, 128, 8
    $region9: #{tpu_custom_call.1} parent=1 // pred_fallthru
      _
    // Predicated region
    $region10: #{tpu_custom_call.1} parent=1 // pred_check
      _
    $region11: #{tpu_custom_call.1} parent=1 // pred_check_branch
      %39 = sbr.rel (0) target = $region13
    $region12: #{tpu_custom_call.1} parent=1 // pred_region
      _
    $region13: #{tpu_custom_call.1} parent=1 // pred_fallthru
      _
    // Predicated region
    $region14: #{tpu_custom_call.1} parent=1 // pred_check
      _
    $region15: #{tpu_custom_call.1} parent=1 // pred_check_branch
      %41 = sbr.rel (0) target = $region17
    $region16: #{tpu_custom_call.1} parent=1 // pred_region
      _
    $region17: #{tpu_custom_call.1} parent=1 // pred_fallthru
      _
    // Predicated region
    $region18: #{tpu_custom_call.1} parent=1 // pred_check
      _
    $region19: #{tpu_custom_call.1} parent=1 // pred_check_branch
      %43 = sbr.rel (0) target = $region21
    $region20: #{tpu_custom_call.1} parent=1 // pred_region
      %44 = dma.done [#allocation4], 256
    $region21: #{tpu_custom_call.1} parent=1 // pred_fallthru
      _
    // Predicated region
    $region22: #{tpu_custom_call.1} parent=1 // pred_check
      _
    $region23: #{tpu_custom_call.1} parent=1 // pred_check_branch
      %46 = sbr.rel (0) target = $region25
    $region24: #{tpu_custom_call.1} parent=1 // pred_region
      %47 = dma.done [#allocation7], 2048
    $region25: #{tpu_custom_call.1} parent=1 // pred_fallthru
      _
    %p48 = scmp.eq.s32.totalorder 0, 0
    // Predicated region
    $region26: #{tpu_custom_call.1} parent=1 // pred_check
      %p49 = pneg %p48
    $region27: #{tpu_custom_call.1} parent=1 // pred_check_branch
      %51 = sbr.rel (%p49) target = $region29
    $region28: #{tpu_custom_call.1} parent=1 // pred_region
      %52 = vst [vmem:[#allocation2] sm:$0xff] 0.0
    $region29: #{tpu_custom_call.1} parent=1 // pred_fallthru
      _
    %v53 = vld [vmem:[#allocation3] sm:$0xff]
    %v54 = vld [vmem:[#allocation3 + $0x8] sm:$0xff]
    %v55 = vmul.f32 %v53, %v53
    %v56 = vmul.f32 %v54, %v54
    %57 = vadd.xlane.f32.xlu0 %v55
    %v58 = vpop.xlane.xlu0 %57
    %59 = vadd.xlane.f32.xlu0 %v56
    %v60 = vpop.xlane.xlu0 %59
    %v61 = vmax.f32 %v58, 1e-24
    %v62 = vmax.f32 %v60, 1e-24
    %v63 = vrsqrt.pop %v61
    %v64 = vrsqrt.pop %v62
    %v65 = vld [vmem:[#allocation6] sm:$0xff]
    %v66 = vld [vmem:[#allocation6 + $0x8] sm:$0xff]
    %v67 = vld [vmem:[#allocation6 + $0x10] sm:$0xff]
    %v68 = vld [vmem:[#allocation6 + $0x18] sm:$0xff]
    %v69 = vld [vmem:[#allocation6 + $0x20] sm:$0xff]
    %v70 = vld [vmem:[#allocation6 + $0x28] sm:$0xff]
    %v71 = vld [vmem:[#allocation6 + $0x30] sm:$0xff]
    %v72 = vld [vmem:[#allocation6 + $0x38] sm:$0xff]
    %v73 = vld [vmem:[#allocation6 + $0x40] sm:$0xff]
    %v74 = vld [vmem:[#allocation6 + $0x48] sm:$0xff]
    %v75 = vld [vmem:[#allocation6 + $0x50] sm:$0xff]
    %v76 = vld [vmem:[#allocation6 + $0x58] sm:$0xff]
    %v77 = vld [vmem:[#allocation6 + $0x60] sm:$0xff]
    %v78 = vld [vmem:[#allocation6 + $0x68] sm:$0xff]
    %v79 = vld [vmem:[#allocation6 + $0x70] sm:$0xff]
    %v80 = vld [vmem:[#allocation6 + $0x78] sm:$0xff]
    %81 = vmatprep.subr.mxu0 0.0
    %v82 = vand.u32 %v65, 4294901760
    %83 = vmatpush1.msra.mxu0 %v82
    %84 = vmatprep.subr.mxu0 0.0
    %v85 = vand.u32 %v66, 4294901760
    %86 = vmatpush1.msra.mxu0 %v85
    %87 = vmatprep.subr.mxu0 0.0
    %v88 = vand.u32 %v67, 4294901760
    %89 = vmatpush1.msra.mxu0 %v88
    %90 = vmatprep.subr.mxu0 0.0
    %v91 = vand.u32 %v68, 4294901760
    %92 = vmatpush1.msra.mxu0 %v91
    %93 = vmatprep.subr.mxu0 0.0
    %v94 = vand.u32 %v69, 4294901760
    %95 = vmatpush1.msra.mxu0 %v94
    %96 = vmatprep.subr.mxu0 0.0
    %v97 = vand.u32 %v70, 4294901760
    %98 = vmatpush1.msra.mxu0 %v97
    %99 = vmatprep.subr.mxu0 0.0
    %v100 = vand.u32 %v71, 4294901760
    %101 = vmatpush1.msra.mxu0 %v100
    %102 = vmatprep.subr.mxu0 0.0
    %v103 = vand.u32 %v72, 4294901760
    %104 = vmatpush1.msra.mxu0 %v103
    %105 = vmatprep.subr.mxu0 0.0
    %v106 = vand.u32 %v73, 4294901760
    %107 = vmatpush1.msra.mxu0 %v106
    %108 = vmatprep.subr.mxu0 0.0
    %v109 = vand.u32 %v74, 4294901760
    %110 = vmatpush1.msra.mxu0 %v109
    %111 = vmatprep.subr.mxu0 0.0
    %v112 = vand.u32 %v75, 4294901760
    %113 = vmatpush1.msra.mxu0 %v112
    %114 = vmatprep.subr.mxu0 0.0
    %v115 = vand.u32 %v76, 4294901760
    %116 = vmatpush1.msra.mxu0 %v115
    %117 = vmatprep.subr.mxu0 0.0
    %v118 = vand.u32 %v77, 4294901760
    %119 = vmatpush1.msra.mxu0 %v118
    %120 = vmatprep.subr.mxu0 0.0
    %v121 = vand.u32 %v78, 4294901760
    %122 = vmatpush1.msra.mxu0 %v121
    %123 = vmatprep.subr.mxu0 0.0
    %v124 = vand.u32 %v79, 4294901760
    %125 = vmatpush1.msra.mxu0 %v124
    %126 = vmatprep.subr.mxu0 0.0
    %v127 = vand.u32 %v80, 4294901760
    %128 = vmatpush1.msra.mxu0 %v127
    %129 = vmatprep.subr.mxu0 0.0
    %130 = vmatpush1.msra.mxu0 0.0
    %131 = vmatprep.subr.mxu0 0.0
    %132 = vmatpush1.msra.mxu0 0.0
    %133 = vmatprep.subr.mxu0 0.0
    %134 = vmatpush1.msra.mxu0 0.0
    %135 = vmatprep.subr.mxu0 0.0
    %136 = vmatpush1.msra.mxu0 0.0
    %137 = vmatprep.subr.mxu0 0.0
    %138 = vmatpush1.msra.mxu0 0.0
    %139 = vmatprep.subr.mxu0 0.0
    %140 = vmatpush1.msra.mxu0 0.0
    %141 = vmatprep.subr.mxu0 0.0
    %142 = vmatpush1.msra.mxu0 0.0
    %143 = vmatprep.subr.mxu0 0.0
    %144 = vmatpush1.msra.mxu0 0.0
    %145 = vmatprep.subr.mxu0 0.0
    %146 = vmatpush1.msra.mxu0 0.0
    %147 = vmatprep.subr.mxu0 0.0
    %148 = vmatpush1.msra.mxu0 0.0
    %149 = vmatprep.subr.mxu0 0.0
    %150 = vmatpush1.msra.mxu0 0.0
    %151 = vmatprep.subr.mxu0 0.0
    %152 = vmatpush1.msra.mxu0 0.0
    %153 = vmatprep.subr.mxu0 0.0
    %154 = vmatpush1.msra.mxu0 0.0
    %155 = vmatprep.subr.mxu0 0.0
    %156 = vmatpush1.msra.mxu0 0.0
    %157 = vmatprep.subr.mxu0 0.0
    %158 = vmatpush1.msra.mxu0 0.0
    %159 = vmatprep.subr.mxu0 0.0
    %160 = vmatpush1.msra.mxu0 0.0
    %161 = vmatprep.mubr.f32.mxu0 0.0
    %v162 = vand.u32 %v53, 4294901760
    %v163 = vsub.f32 %v53, %v162
    %v164 = vand.u32 %v163, 4294901760
    %v165 = vsub.f32 %v163, %v164
    %v166 = vand.u32 %v165, 4294901760
    %167 = vmatmul.mubr.f32.gmra.mrb[0].mxu0 %v166
    %v168 = vpop.f32.mrb[0].mxu0
    %v169 = vadd.f32 0.0, %v168
    %v170 = vpop.f32.mrb[0].mxu0
    %171 = vmatprep.mubr.f32.mxu0 0.0
    %v172 = vand.u32 %v54, 4294901760
    %v173 = vsub.f32 %v54, %v172
    %v174 = vand.u32 %v173, 4294901760
    %v175 = vsub.f32 %v173, %v174
    %v176 = vand.u32 %v175, 4294901760
    %177 = vmatmul.mubr.f32.gmra.mrb[0].mxu0 %v176
    %v178 = vpop.f32.mrb[0].mxu0
    %v179 = vadd.f32 0.0, %v178
    %v180 = vpop.f32.mrb[0].mxu0
    %181 = vdwg.mxu0
    %182 = vmatprep.subr.mxu0 0.0
    %v183 = vand.u32 %v65, 4294901760
    %v184 = vsub.f32 %v65, %v183
    %v185 = vand.u32 %v184, 4294901760
    %v186 = vsub.f32 %v184, %v185
    %v187 = vand.u32 %v186, 4294901760
    %188 = vmatpush1.msra.mxu0 %v187
    %189 = vmatprep.subr.mxu0 0.0
    %v190 = vand.u32 %v66, 4294901760
    %v191 = vsub.f32 %v66, %v190
    %v192 = vand.u32 %v191, 4294901760
    %v193 = vsub.f32 %v191, %v192
    %v194 = vand.u32 %v193, 4294901760
    %195 = vmatpush1.msra.mxu0 %v194
    %196 = vmatprep.subr.mxu0 0.0
    %v197 = vand.u32 %v67, 4294901760
    %v198 = vsub.f32 %v67, %v197
    %v199 = vand.u32 %v198, 4294901760
    %v200 = vsub.f32 %v198, %v199
    %v201 = vand.u32 %v200, 4294901760
    %202 = vmatpush1.msra.mxu0 %v201
    %203 = vmatprep.subr.mxu0 0.0
    %v204 = vand.u32 %v68, 4294901760
    %v205 = vsub.f32 %v68, %v204
    %v206 = vand.u32 %v205, 4294901760
    %v207 = vsub.f32 %v205, %v206
    %v208 = vand.u32 %v207, 4294901760
    %209 = vmatpush1.msra.mxu0 %v208
    %210 = vmatprep.subr.mxu0 0.0
    %v211 = vand.u32 %v69, 4294901760
    %v212 = vsub.f32 %v69, %v211
    %v213 = vand.u32 %v212, 4294901760
    %v214 = vsub.f32 %v212, %v213
    %v215 = vand.u32 %v214, 4294901760
    %216 = vmatpush1.msra.mxu0 %v215
    %217 = vmatprep.subr.mxu0 0.0
    %v218 = vand.u32 %v70, 4294901760
    %v219 = vsub.f32 %v70, %v218
    %v220 = vand.u32 %v219, 4294901760
    %v221 = vsub.f32 %v219, %v220
    %v222 = vand.u32 %v221, 4294901760
    %223 = vmatpush1.msra.mxu0 %v222
    %224 = vmatprep.subr.mxu0 0.0
    %v225 = vand.u32 %v71, 4294901760
    %v226 = vsub.f32 %v71, %v225
    %v227 = vand.u32 %v226, 4294901760
    %v228 = vsub.f32 %v226, %v227
    %v229 = vand.u32 %v228, 4294901760
    %230 = vmatpush1.msra.mxu0 %v229
    %231 = vmatprep.subr.mxu0 0.0
    %v232 = vand.u32 %v72, 4294901760
    %v233 = vsub.f32 %v72, %v232
    %v234 = vand.u32 %v233, 4294901760
    %v235 = vsub.f32 %v233, %v234
    %v236 = vand.u32 %v235, 4294901760
    %237 = vmatpush1.msra.mxu0 %v236
    %238 = vmatprep.subr.mxu0 0.0
    %v239 = vand.u32 %v73, 4294901760
    %v240 = vsub.f32 %v73, %v239
    %v241 = vand.u32 %v240, 4294901760
    %v242 = vsub.f32 %v240, %v241
    %v243 = vand.u32 %v242, 4294901760
    %244 = vmatpush1.msra.mxu0 %v243
    %245 = vmatprep.subr.mxu0 0.0
    %v246 = vand.u32 %v74, 4294901760
    %v247 = vsub.f32 %v74, %v246
    %v248 = vand.u32 %v247, 4294901760
    %v249 = vsub.f32 %v247, %v248
    %v250 = vand.u32 %v249, 4294901760
    %251 = vmatpush1.msra.mxu0 %v250
    %252 = vmatprep.subr.mxu0 0.0
    %v253 = vand.u32 %v75, 4294901760
    %v254 = vsub.f32 %v75, %v253
    %v255 = vand.u32 %v254, 4294901760
    %v256 = vsub.f32 %v254, %v255
    %v257 = vand.u32 %v256, 4294901760
    %258 = vmatpush1.msra.mxu0 %v257
    %259 = vmatprep.subr.mxu0 0.0
    %v260 = vand.u32 %v76, 4294901760
    %v261 = vsub.f32 %v76, %v260
    %v262 = vand.u32 %v261, 4294901760
    %v263 = vsub.f32 %v261, %v262
    %v264 = vand.u32 %v263, 4294901760
    %265 = vmatpush1.msra.mxu0 %v264
    %266 = vmatprep.subr.mxu0 0.0
    %v267 = vand.u32 %v77, 4294901760
    %v268 = vsub.f32 %v77, %v267
    %v269 = vand.u32 %v268, 4294901760
    %v270 = vsub.f32 %v268, %v269
    %v271 = vand.u32 %v270, 4294901760
    %272 = vmatpush1.msra.mxu0 %v271
    %273 = vmatprep.subr.mxu0 0.0
    %v274 = vand.u32 %v78, 4294901760
    %v275 = vsub.f32 %v78, %v274
    %v276 = vand.u32 %v275, 4294901760
    %v277 = vsub.f32 %v275, %v276
    %v278 = vand.u32 %v277, 4294901760
    %279 = vmatpush1.msra.mxu0 %v278
    %280 = vmatprep.subr.mxu0 0.0
    %v281 = vand.u32 %v79, 4294901760
    %v282 = vsub.f32 %v79, %v281
    %v283 = vand.u32 %v282, 4294901760
    %v284 = vsub.f32 %v282, %v283
    %v285 = vand.u32 %v284, 4294901760
    %286 = vmatpush1.msra.mxu0 %v285
    %287 = vmatprep.subr.mxu0 0.0
    %v288 = vand.u32 %v80, 4294901760
    %v289 = vsub.f32 %v80, %v288
    %v290 = vand.u32 %v289, 4294901760
    %v291 = vsub.f32 %v289, %v290
    %v292 = vand.u32 %v291, 4294901760
    %293 = vmatpush1.msra.mxu0 %v292
    %294 = vmatprep.subr.mxu0 0.0
    %295 = vmatpush1.msra.mxu0 0.0
    %296 = vmatprep.subr.mxu0 0.0
    %297 = vmatpush1.msra.mxu0 0.0
    %298 = vmatprep.subr.mxu0 0.0
    %299 = vmatpush1.msra.mxu0 0.0
    %300 = vmatprep.subr.mxu0 0.0
    %301 = vmatpush1.msra.mxu0 0.0
    %302 = vmatprep.subr.mxu0 0.0
    %303 = vmatpush1.msra.mxu0 0.0
    %304 = vmatprep.subr.mxu0 0.0
    %305 = vmatpush1.msra.mxu0 0.0
    %306 = vmatprep.subr.mxu0 0.0
    %307 = vmatpush1.msra.mxu0 0.0
    %308 = vmatprep.subr.mxu0 0.0
    %309 = vmatpush1.msra.mxu0 0.0
    %310 = vmatprep.subr.mxu0 0.0
    %311 = vmatpush1.msra.mxu0 0.0
    %312 = vmatprep.subr.mxu0 0.0
    %313 = vmatpush1.msra.mxu0 0.0
    %314 = vmatprep.subr.mxu0 0.0
    %315 = vmatpush1.msra.mxu0 0.0
    %316 = vmatprep.subr.mxu0 0.0
    %317 = vmatpush1.msra.mxu0 0.0
    %318 = vmatprep.subr.mxu0 0.0
    %319 = vmatpush1.msra.mxu0 0.0
    %320 = vmatprep.subr.mxu0 0.0
    %321 = vmatpush1.msra.mxu0 0.0
    %322 = vmatprep.subr.mxu0 0.0
    %323 = vmatpush1.msra.mxu0 0.0
    %324 = vmatprep.subr.mxu0 0.0
    %325 = vmatpush1.msra.mxu0 0.0
    %326 = vmatprep.mubr.f32.mxu0 0.0
    %v327 = vand.u32 %v53, 4294901760
    %328 = vmatmul.mubr.f32.gmra.mrb[0].mxu0 %v327
    %v329 = vpop.f32.mrb[0].mxu0
    %v330 = vadd.f32 %v169, %v329
    %v331 = vpop.f32.mrb[0].mxu0
    %332 = vmatprep.mubr.f32.mxu0 0.0
    %v333 = vand.u32 %v54, 4294901760
    %334 = vmatmul.mubr.f32.gmra.mrb[0].mxu0 %v333
    %v335 = vpop.f32.mrb[0].mxu0
    %v336 = vadd.f32 %v179, %v335
    %v337 = vpop.f32.mrb[0].mxu0
    %338 = vdwg.mxu0
    %339 = vmatprep.subr.mxu0 0.0
    %v340 = vand.u32 %v65, 4294901760
    %v341 = vsub.f32 %v65, %v340
    %342 = vmatpush1.msra.mxu0 %v341
    %343 = vmatprep.subr.mxu0 0.0
    %v344 = vand.u32 %v66, 4294901760
    %v345 = vsub.f32 %v66, %v344
    %346 = vmatpush1.msra.mxu0 %v345
    %347 = vmatprep.subr.mxu0 0.0
    %v348 = vand.u32 %v67, 4294901760
    %v349 = vsub.f32 %v67, %v348
    %350 = vmatpush1.msra.mxu0 %v349
    %351 = vmatprep.subr.mxu0 0.0
    %v352 = vand.u32 %v68, 4294901760
    %v353 = vsub.f32 %v68, %v352
    %354 = vmatpush1.msra.mxu0 %v353
    %355 = vmatprep.subr.mxu0 0.0
    %v356 = vand.u32 %v69, 4294901760
    %v357 = vsub.f32 %v69, %v356
    %358 = vmatpush1.msra.mxu0 %v357
    %359 = vmatprep.subr.mxu0 0.0
    %v360 = vand.u32 %v70, 4294901760
    %v361 = vsub.f32 %v70, %v360
    %362 = vmatpush1.msra.mxu0 %v361
    %363 = vmatprep.subr.mxu0 0.0
    %v364 = vand.u32 %v71, 4294901760
    %v365 = vsub.f32 %v71, %v364
    %366 = vmatpush1.msra.mxu0 %v365
    %367 = vmatprep.subr.mxu0 0.0
    %v368 = vand.u32 %v72, 4294901760
    %v369 = vsub.f32 %v72, %v368
    %370 = vmatpush1.msra.mxu0 %v369
    %371 = vmatprep.subr.mxu0 0.0
    %v372 = vand.u32 %v73, 4294901760
    %v373 = vsub.f32 %v73, %v372
    %374 = vmatpush1.msra.mxu0 %v373
    %375 = vmatprep.subr.mxu0 0.0
    %v376 = vand.u32 %v74, 4294901760
    %v377 = vsub.f32 %v74, %v376
    %378 = vmatpush1.msra.mxu0 %v377
    %379 = vmatprep.subr.mxu0 0.0
    %v380 = vand.u32 %v75, 4294901760
    %v381 = vsub.f32 %v75, %v380
    %382 = vmatpush1.msra.mxu0 %v381
    %383 = vmatprep.subr.mxu0 0.0
    %v384 = vand.u32 %v76, 4294901760
    %v385 = vsub.f32 %v76, %v384
    %386 = vmatpush1.msra.mxu0 %v385
    %387 = vmatprep.subr.mxu0 0.0
    %v388 = vand.u32 %v77, 4294901760
    %v389 = vsub.f32 %v77, %v388
    %390 = vmatpush1.msra.mxu0 %v389
    %391 = vmatprep.subr.mxu0 0.0
    %v392 = vand.u32 %v78, 4294901760
    %v393 = vsub.f32 %v78, %v392
    %394 = vmatpush1.msra.mxu0 %v393
    %395 = vmatprep.subr.mxu0 0.0
    %v396 = vand.u32 %v79, 4294901760
    %v397 = vsub.f32 %v79, %v396
    %398 = vmatpush1.msra.mxu0 %v397
    %399 = vmatprep.subr.mxu0 0.0
    %v400 = vand.u32 %v80, 4294901760
    %v401 = vsub.f32 %v80, %v400
    %402 = vmatpush1.msra.mxu0 %v401
    %403 = vmatprep.subr.mxu0 0.0
    %404 = vmatpush1.msra.mxu0 0.0
    %405 = vmatprep.subr.mxu0 0.0
    %406 = vmatpush1.msra.mxu0 0.0
    %407 = vmatprep.subr.mxu0 0.0
    %408 = vmatpush1.msra.mxu0 0.0
    %409 = vmatprep.subr.mxu0 0.0
    %410 = vmatpush1.msra.mxu0 0.0
    %411 = vmatprep.subr.mxu0 0.0
    %412 = vmatpush1.msra.mxu0 0.0
    %413 = vmatprep.subr.mxu0 0.0
    %414 = vmatpush1.msra.mxu0 0.0
    %415 = vmatprep.subr.mxu0 0.0
    %416 = vmatpush1.msra.mxu0 0.0
    %417 = vmatprep.subr.mxu0 0.0
    %418 = vmatpush1.msra.mxu0 0.0
    %419 = vmatprep.subr.mxu0 0.0
    %420 = vmatpush1.msra.mxu0 0.0
    %421 = vmatprep.subr.mxu0 0.0
    %422 = vmatpush1.msra.mxu0 0.0
    %423 = vmatprep.subr.mxu0 0.0
    %424 = vmatpush1.msra.mxu0 0.0
    %425 = vmatprep.subr.mxu0 0.0
    %426 = vmatpush1.msra.mxu0 0.0
    %427 = vmatprep.subr.mxu0 0.0
    %428 = vmatpush1.msra.mxu0 0.0
    %429 = vmatprep.subr.mxu0 0.0
    %430 = vmatpush1.msra.mxu0 0.0
    %431 = vmatprep.subr.mxu0 0.0
    %432 = vmatpush1.msra.mxu0 0.0
    %433 = vmatprep.subr.mxu0 0.0
    %434 = vmatpush1.msra.mxu0 0.0
    %435 = vmatprep.mubr.f32.mxu0 0.0
    %v436 = vand.u32 %v53, 4294901760
    %v437 = vsub.f32 %v53, %v436
    %438 = vmatmul.mubr.f32.gmra.mrb[0].mxu0 %v437
    %v439 = vpop.f32.mrb[0].mxu0
    %v440 = vadd.f32 %v330, %v439
    %v441 = vpop.f32.mrb[0].mxu0
    %442 = vmatprep.mubr.f32.mxu0 0.0
    %v443 = vand.u32 %v54, 4294901760
    %v444 = vsub.f32 %v54, %v443
    %445 = vmatmul.mubr.f32.gmra.mrb[0].mxu0 %v444
    %v446 = vpop.f32.mrb[0].mxu0
    %v447 = vadd.f32 %v336, %v446
    %v448 = vpop.f32.mrb[0].mxu0
    %449 = vdwg.mxu0
    %450 = vmatprep.subr.mxu0 0.0
    %v451 = vand.u32 %v65, 4294901760
    %452 = vmatpush1.msra.mxu0 %v451
    %453 = vmatprep.subr.mxu0 0.0
    %v454 = vand.u32 %v66, 4294901760
    %455 = vmatpush1.msra.mxu0 %v454
    %456 = vmatprep.subr.mxu0 0.0
    %v457 = vand.u32 %v67, 4294901760
    %458 = vmatpush1.msra.mxu0 %v457
    %459 = vmatprep.subr.mxu0 0.0
    %v460 = vand.u32 %v68, 4294901760
    %461 = vmatpush1.msra.mxu0 %v460
    %462 = vmatprep.subr.mxu0 0.0
    %v463 = vand.u32 %v69, 4294901760
    %464 = vmatpush1.msra.mxu0 %v463
    %465 = vmatprep.subr.mxu0 0.0
    %v466 = vand.u32 %v70, 4294901760
    %467 = vmatpush1.msra.mxu0 %v466
    %468 = vmatprep.subr.mxu0 0.0
    %v469 = vand.u32 %v71, 4294901760
    %470 = vmatpush1.msra.mxu0 %v469
    %471 = vmatprep.subr.mxu0 0.0
    %v472 = vand.u32 %v72, 4294901760
    %473 = vmatpush1.msra.mxu0 %v472
    %474 = vmatprep.subr.mxu0 0.0
    %v475 = vand.u32 %v73, 4294901760
    %476 = vmatpush1.msra.mxu0 %v475
    %477 = vmatprep.subr.mxu0 0.0
    %v478 = vand.u32 %v74, 4294901760
    %479 = vmatpush1.msra.mxu0 %v478
    %480 = vmatprep.subr.mxu0 0.0
    %v481 = vand.u32 %v75, 4294901760
    %482 = vmatpush1.msra.mxu0 %v481
    %483 = vmatprep.subr.mxu0 0.0
    %v484 = vand.u32 %v76, 4294901760
    %485 = vmatpush1.msra.mxu0 %v484
    %486 = vmatprep.subr.mxu0 0.0
    %v487 = vand.u32 %v77, 4294901760
    %488 = vmatpush1.msra.mxu0 %v487
    %489 = vmatprep.subr.mxu0 0.0
    %v490 = vand.u32 %v78, 4294901760
    %491 = vmatpush1.msra.mxu0 %v490
    %492 = vmatprep.subr.mxu0 0.0
    %v493 = vand.u32 %v79, 4294901760
    %494 = vmatpush1.msra.mxu0 %v493
    %495 = vmatprep.subr.mxu0 0.0
    %v496 = vand.u32 %v80, 4294901760
    %497 = vmatpush1.msra.mxu0 %v496
    %498 = vmatprep.subr.mxu0 0.0
    %499 = vmatpush1.msra.mxu0 0.0
    %500 = vmatprep.subr.mxu0 0.0
    %501 = vmatpush1.msra.mxu0 0.0
    %502 = vmatprep.subr.mxu0 0.0
    %503 = vmatpush1.msra.mxu0 0.0
    %504 = vmatprep.subr.mxu0 0.0
    %505 = vmatpush1.msra.mxu0 0.0
    %506 = vmatprep.subr.mxu0 0.0
    %507 = vmatpush1.msra.mxu0 0.0
    %508 = vmatprep.subr.mxu0 0.0
    %509 = vmatpush1.msra.mxu0 0.0
    %510 = vmatprep.subr.mxu0 0.0
    %511 = vmatpush1.msra.mxu0 0.0
    %512 = vmatprep.subr.mxu0 0.0
    %513 = vmatpush1.msra.mxu0 0.0
    %514 = vmatprep.subr.mxu0 0.0
    %515 = vmatpush1.msra.mxu0 0.0
    %516 = vmatprep.subr.mxu0 0.0
    %517 = vmatpush1.msra.mxu0 0.0
    %518 = vmatprep.subr.mxu0 0.0
    %519 = vmatpush1.msra.mxu0 0.0
    %520 = vmatprep.subr.mxu0 0.0
    %521 = vmatpush1.msra.mxu0 0.0
    %522 = vmatprep.subr.mxu0 0.0
    %523 = vmatpush1.msra.mxu0 0.0
    %524 = vmatprep.subr.mxu0 0.0
    %525 = vmatpush1.msra.mxu0 0.0
    %526 = vmatprep.subr.mxu0 0.0
    %527 = vmatpush1.msra.mxu0 0.0
    %528 = vmatprep.subr.mxu0 0.0
    %529 = vmatpush1.msra.mxu0 0.0
    %530 = vmatprep.mubr.f32.mxu0 0.0
    %v531 = vand.u32 %v53, 4294901760
    %v532 = vsub.f32 %v53, %v531
    %v533 = vand.u32 %v532, 4294901760
    %534 = vmatmul.mubr.f32.gmra.mrb[0].mxu0 %v533
    %v535 = vpop.f32.mrb[0].mxu0
    %v536 = vadd.f32 %v440, %v535
    %v537 = vpop.f32.mrb[0].mxu0
    %538 = vmatprep.mubr.f32.mxu0 0.0
    %v539 = vand.u32 %v54, 4294901760
    %v540 = vsub.f32 %v54, %v539
    %v541 = vand.u32 %v540, 4294901760
    %542 = vmatmul.mubr.f32.gmra.mrb[0].mxu0 %v541
    %v543 = vpop.f32.mrb[0].mxu0
    %v544 = vadd.f32 %v447, %v543
    %v545 = vpop.f32.mrb[0].mxu0
    %546 = vdwg.mxu0
    %547 = vmatprep.subr.mxu0 0.0
    %v548 = vand.u32 %v65, 4294901760
    %v549 = vsub.f32 %v65, %v548
    %v550 = vand.u32 %v549, 4294901760
    %551 = vmatpush1.msra.mxu0 %v550
    %552 = vmatprep.subr.mxu0 0.0
    %v553 = vand.u32 %v66, 4294901760
    %v554 = vsub.f32 %v66, %v553
    %v555 = vand.u32 %v554, 4294901760
    %556 = vmatpush1.msra.mxu0 %v555
    %557 = vmatprep.subr.mxu0 0.0
    %v558 = vand.u32 %v67, 4294901760
    %v559 = vsub.f32 %v67, %v558
    %v560 = vand.u32 %v559, 4294901760
    %561 = vmatpush1.msra.mxu0 %v560
    %562 = vmatprep.subr.mxu0 0.0
    %v563 = vand.u32 %v68, 4294901760
    %v564 = vsub.f32 %v68, %v563
    %v565 = vand.u32 %v564, 4294901760
    %566 = vmatpush1.msra.mxu0 %v565
    %567 = vmatprep.subr.mxu0 0.0
    %v568 = vand.u32 %v69, 4294901760
    %v569 = vsub.f32 %v69, %v568
    %v570 = vand.u32 %v569, 4294901760
    %571 = vmatpush1.msra.mxu0 %v570
    %572 = vmatprep.subr.mxu0 0.0
    %v573 = vand.u32 %v70, 4294901760
    %v574 = vsub.f32 %v70, %v573
    %v575 = vand.u32 %v574, 4294901760
    %576 = vmatpush1.msra.mxu0 %v575
    %577 = vmatprep.subr.mxu0 0.0
    %v578 = vand.u32 %v71, 4294901760
    %v579 = vsub.f32 %v71, %v578
    %v580 = vand.u32 %v579, 4294901760
    %581 = vmatpush1.msra.mxu0 %v580
    %582 = vmatprep.subr.mxu0 0.0
    %v583 = vand.u32 %v72, 4294901760
    %v584 = vsub.f32 %v72, %v583
    %v585 = vand.u32 %v584, 4294901760
    %586 = vmatpush1.msra.mxu0 %v585
    %587 = vmatprep.subr.mxu0 0.0
    %v588 = vand.u32 %v73, 4294901760
    %v589 = vsub.f32 %v73, %v588
    %v590 = vand.u32 %v589, 4294901760
    %591 = vmatpush1.msra.mxu0 %v590
    %592 = vmatprep.subr.mxu0 0.0
    %v593 = vand.u32 %v74, 4294901760
    %v594 = vsub.f32 %v74, %v593
    %v595 = vand.u32 %v594, 4294901760
    %596 = vmatpush1.msra.mxu0 %v595
    %597 = vmatprep.subr.mxu0 0.0
    %v598 = vand.u32 %v75, 4294901760
    %v599 = vsub.f32 %v75, %v598
    %v600 = vand.u32 %v599, 4294901760
    %601 = vmatpush1.msra.mxu0 %v600
    %602 = vmatprep.subr.mxu0 0.0
    %v603 = vand.u32 %v76, 4294901760
    %v604 = vsub.f32 %v76, %v603
    %v605 = vand.u32 %v604, 4294901760
    %606 = vmatpush1.msra.mxu0 %v605
    %607 = vmatprep.subr.mxu0 0.0
    %v608 = vand.u32 %v77, 4294901760
    %v609 = vsub.f32 %v77, %v608
    %v610 = vand.u32 %v609, 4294901760
    %611 = vmatpush1.msra.mxu0 %v610
    %612 = vmatprep.subr.mxu0 0.0
    %v613 = vand.u32 %v78, 4294901760
    %v614 = vsub.f32 %v78, %v613
    %v615 = vand.u32 %v614, 4294901760
    %616 = vmatpush1.msra.mxu0 %v615
    %617 = vmatprep.subr.mxu0 0.0
    %v618 = vand.u32 %v79, 4294901760
    %v619 = vsub.f32 %v79, %v618
    %v620 = vand.u32 %v619, 4294901760
    %621 = vmatpush1.msra.mxu0 %v620
    %622 = vmatprep.subr.mxu0 0.0
    %v623 = vand.u32 %v80, 4294901760
    %v624 = vsub.f32 %v80, %v623
    %v625 = vand.u32 %v624, 4294901760
    %626 = vmatpush1.msra.mxu0 %v625
    %627 = vmatprep.subr.mxu0 0.0
    %628 = vmatpush1.msra.mxu0 0.0
    %629 = vmatprep.subr.mxu0 0.0
    %630 = vmatpush1.msra.mxu0 0.0
    %631 = vmatprep.subr.mxu0 0.0
    %632 = vmatpush1.msra.mxu0 0.0
    %633 = vmatprep.subr.mxu0 0.0
    %634 = vmatpush1.msra.mxu0 0.0
    %635 = vmatprep.subr.mxu0 0.0
    %636 = vmatpush1.msra.mxu0 0.0
    %637 = vmatprep.subr.mxu0 0.0
    %638 = vmatpush1.msra.mxu0 0.0
    %639 = vmatprep.subr.mxu0 0.0
    %640 = vmatpush1.msra.mxu0 0.0
    %641 = vmatprep.subr.mxu0 0.0
    %642 = vmatpush1.msra.mxu0 0.0
    %643 = vmatprep.subr.mxu0 0.0
    %644 = vmatpush1.msra.mxu0 0.0
    %645 = vmatprep.subr.mxu0 0.0
    %646 = vmatpush1.msra.mxu0 0.0
    %647 = vmatprep.subr.mxu0 0.0
    %648 = vmatpush1.msra.mxu0 0.0
    %649 = vmatprep.subr.mxu0 0.0
    %650 = vmatpush1.msra.mxu0 0.0
    %651 = vmatprep.subr.mxu0 0.0
    %652 = vmatpush1.msra.mxu0 0.0
    %653 = vmatprep.subr.mxu0 0.0
    %654 = vmatpush1.msra.mxu0 0.0
    %655 = vmatprep.subr.mxu0 0.0
    %656 = vmatpush1.msra.mxu0 0.0
    %657 = vmatprep.subr.mxu0 0.0
    %658 = vmatpush1.msra.mxu0 0.0
    %659 = vmatprep.mubr.f32.mxu0 0.0
    %v660 = vand.u32 %v53, 4294901760
    %661 = vmatmul.mubr.f32.gmra.mrb[0].mxu0 %v660
    %v662 = vpop.f32.mrb[0].mxu0
    %v663 = vadd.f32 %v536, %v662
    %v664 = vpop.f32.mrb[0].mxu0
    %665 = vmatprep.mubr.f32.mxu0 0.0
    %v666 = vand.u32 %v54, 4294901760
    %667 = vmatmul.mubr.f32.gmra.mrb[0].mxu0 %v666
    %v668 = vpop.f32.mrb[0].mxu0
    %v669 = vadd.f32 %v544, %v668
    %v670 = vpop.f32.mrb[0].mxu0
    %671 = vdwg.mxu0
    %672 = vmatprep.subr.mxu0 0.0
    %v673 = vand.u32 %v65, 4294901760
    %674 = vmatpush1.msra.mxu0 %v673
    %675 = vmatprep.subr.mxu0 0.0
    %v676 = vand.u32 %v66, 4294901760
    %677 = vmatpush1.msra.mxu0 %v676
    %678 = vmatprep.subr.mxu0 0.0
    %v679 = vand.u32 %v67, 4294901760
    %680 = vmatpush1.msra.mxu0 %v679
    %681 = vmatprep.subr.mxu0 0.0
    %v682 = vand.u32 %v68, 4294901760
    %683 = vmatpush1.msra.mxu0 %v682
    %684 = vmatprep.subr.mxu0 0.0
    %v685 = vand.u32 %v69, 4294901760
    %686 = vmatpush1.msra.mxu0 %v685
    %687 = vmatprep.subr.mxu0 0.0
    %v688 = vand.u32 %v70, 4294901760
    %689 = vmatpush1.msra.mxu0 %v688
    %690 = vmatprep.subr.mxu0 0.0
    %v691 = vand.u32 %v71, 4294901760
    %692 = vmatpush1.msra.mxu0 %v691
    %693 = vmatprep.subr.mxu0 0.0
    %v694 = vand.u32 %v72, 4294901760
    %695 = vmatpush1.msra.mxu0 %v694
    %696 = vmatprep.subr.mxu0 0.0
    %v697 = vand.u32 %v73, 4294901760
    %698 = vmatpush1.msra.mxu0 %v697
    %699 = vmatprep.subr.mxu0 0.0
    %v700 = vand.u32 %v74, 4294901760
    %701 = vmatpush1.msra.mxu0 %v700
    %702 = vmatprep.subr.mxu0 0.0
    %v703 = vand.u32 %v75, 4294901760
    %704 = vmatpush1.msra.mxu0 %v703
    %705 = vmatprep.subr.mxu0 0.0
    %v706 = vand.u32 %v76, 4294901760
    %707 = vmatpush1.msra.mxu0 %v706
    %708 = vmatprep.subr.mxu0 0.0
    %v709 = vand.u32 %v77, 4294901760
    %710 = vmatpush1.msra.mxu0 %v709
    %711 = vmatprep.subr.mxu0 0.0
    %v712 = vand.u32 %v78, 4294901760
    %713 = vmatpush1.msra.mxu0 %v712
    %714 = vmatprep.subr.mxu0 0.0
    %v715 = vand.u32 %v79, 4294901760
    %716 = vmatpush1.msra.mxu0 %v715
    %717 = vmatprep.subr.mxu0 0.0
    %v718 = vand.u32 %v80, 4294901760
    %719 = vmatpush1.msra.mxu0 %v718
    %720 = vmatprep.subr.mxu0 0.0
    %721 = vmatpush1.msra.mxu0 0.0
    %722 = vmatprep.subr.mxu0 0.0
    %723 = vmatpush1.msra.mxu0 0.0
    %724 = vmatprep.subr.mxu0 0.0
    %725 = vmatpush1.msra.mxu0 0.0
    %726 = vmatprep.subr.mxu0 0.0
    %727 = vmatpush1.msra.mxu0 0.0
    %728 = vmatprep.subr.mxu0 0.0
    %729 = vmatpush1.msra.mxu0 0.0
    %730 = vmatprep.subr.mxu0 0.0
    %731 = vmatpush1.msra.mxu0 0.0
    %732 = vmatprep.subr.mxu0 0.0
    %733 = vmatpush1.msra.mxu0 0.0
    %734 = vmatprep.subr.mxu0 0.0
    %735 = vmatpush1.msra.mxu0 0.0
    %736 = vmatprep.subr.mxu0 0.0
    %737 = vmatpush1.msra.mxu0 0.0
    %738 = vmatprep.subr.mxu0 0.0
    %739 = vmatpush1.msra.mxu0 0.0
    %740 = vmatprep.subr.mxu0 0.0
    %741 = vmatpush1.msra.mxu0 0.0
    %742 = vmatprep.subr.mxu0 0.0
    %743 = vmatpush1.msra.mxu0 0.0
    %744 = vmatprep.subr.mxu0 0.0
    %745 = vmatpush1.msra.mxu0 0.0
    %746 = vmatprep.subr.mxu0 0.0
    %747 = vmatpush1.msra.mxu0 0.0
    %748 = vmatprep.subr.mxu0 0.0
    %749 = vmatpush1.msra.mxu0 0.0
    %750 = vmatprep.subr.mxu0 0.0
    %751 = vmatpush1.msra.mxu0 0.0
    %752 = vmatprep.mubr.f32.mxu0 0.0
    %v753 = vand.u32 %v53, 4294901760
    %754 = vmatmul.mubr.f32.gmra.mrb[0].mxu0 %v753
    %v755 = vpop.f32.mrb[0].mxu0
    %v756 = vadd.f32 %v663, %v755
    %v757 = vpop.f32.mrb[0].mxu0
    %758 = vmatprep.mubr.f32.mxu0 0.0
    %v759 = vand.u32 %v54, 4294901760
    %760 = vmatmul.mubr.f32.gmra.mrb[0].mxu0 %v759
    %v761 = vpop.f32.mrb[0].mxu0
    %v762 = vadd.f32 %v669, %v761
    %v763 = vpop.f32.mrb[0].mxu0
    %764 = vdwg.mxu0
    %v765 = vmul.f32 %v756, %v63
    %v766 = vmul.f32 %v762, %v64
    %v767 = vmul.f32 %v765, 2.0
    %v768 = vmul.f32 %v766, 2.0
    %v769 = vsub.f32 2.0, %v767
    %v770 = vsub.f32 2.0, %v768
    %v771 = vmax.f32 %v769, 0.0
    %v772 = vmax.f32 %v770, 0.0
    %v773 = vrsqrt.pop %v771
    %v774 = vmul.f32 %v771, %v773
    %vm775 = vcmp.eq.f32.partialorder %v771, inf
    %v776 = vsel %vm775, %v771, %v774
    %vm777 = vcmp.eq.f32.partialorder %v771, 0.0
    %v778 = vand.u32 %v771, 2147483648
    %v779 = vsel %vm777, %v778, %v776
    %v780 = vrsqrt.pop %v772
    %v781 = vmul.f32 %v772, %v780
    %vm782 = vcmp.eq.f32.partialorder %v772, inf
    %v783 = vsel %vm782, %v772, %v781
    %vm784 = vcmp.eq.f32.partialorder %v772, 0.0
    %v785 = vand.u32 %v772, 2147483648
    %v786 = vsel %vm784, %v785, %v783
    %v787 = vmul.f32 %v779, 0.5
    %v788 = vmul.f32 %v786, 0.5
    %v789 = vmax.f32 %v787, 0.0
    %v790 = vmax.f32 %v788, 0.0
    %v791 = vmin.f32 %v789, 1.0
    %v792 = vmin.f32 %v790, 1.0
    %vm793 = vcmp.gt.f32.partialorder %v791, 0.5
    %vm794 = vcmp.gt.f32.partialorder %v792, 0.5
    %v795 = vsub.f32 1.0, %v791
    %v796 = vsub.f32 1.0, %v792
    %v797 = vmul.f32 %v795, 0.5
    %v798 = vmul.f32 %v796, 0.5
    %v799 = vmul.f32 %v791, %v791
    %v800 = vmul.f32 %v792, %v792
    %v801 = vsel %vm793, %v797, %v799
    %v802 = vsel %vm794, %v798, %v800
    %v803 = vrsqrt.pop %v801
    %v804 = vmul.f32 %v801, %v803
    %vm805 = vcmp.eq.f32.partialorder %v801, inf
    %v806 = vsel %vm805, %v801, %v804
    %vm807 = vcmp.eq.f32.partialorder %v801, 0.0
    %v808 = vand.u32 %v801, 2147483648
    %v809 = vsel %vm807, %v808, %v806
    %v810 = vrsqrt.pop %v802
    %v811 = vmul.f32 %v802, %v810
    %vm812 = vcmp.eq.f32.partialorder %v802, inf
    %v813 = vsel %vm812, %v802, %v811
    %vm814 = vcmp.eq.f32.partialorder %v802, 0.0
    %v815 = vand.u32 %v802, 2147483648
    %v816 = vsel %vm814, %v815, %v813
    %v817 = vsel %vm793, %v809, %v791
    %v818 = vsel %vm794, %v816, %v792
    %v819 = vmul.f32 %v801, 0.0421632
    %v820 = vmul.f32 %v802, 0.0421632
    %v821 = vadd.f32 %v819, 0.024181312
    %v822 = vadd.f32 %v820, 0.024181312
    %v823 = vmul.f32 %v821, %v801
    %v824 = vmul.f32 %v822, %v802
    %v825 = vadd.f32 %v823, 0.045470025
    %v826 = vadd.f32 %v824, 0.045470025
    %v827 = vmul.f32 %v825, %v801
    %v828 = vmul.f32 %v826, %v802
    %v829 = vadd.f32 %v827, 0.074953005
    %v830 = vadd.f32 %v828, 0.074953005
    %v831 = vmul.f32 %v829, %v801
    %v832 = vmul.f32 %v830, %v802
    %v833 = vadd.f32 %v831, 0.16666752
    %v834 = vadd.f32 %v832, 0.16666752
    %v835 = vmul.f32 %v833, %v801
    %v836 = vmul.f32 %v834, %v802
    %v837 = vmul.f32 %v835, %v817
    %v838 = vmul.f32 %v836, %v818
    %v839 = vadd.f32 %v837, %v817
    %v840 = vadd.f32 %v838, %v818
    %v841 = vmul.f32 %v839, 2.0
    %v842 = vmul.f32 %v840, 2.0
    %v843 = vsub.f32 1.5707964, %v841
    %v844 = vsub.f32 1.5707964, %v842
    %v845 = vsel %vm793, %v843, %v839
    %v846 = vsel %vm794, %v844, %v840
    %v847 = vmul.f32 %v845, %v845
    %v848 = vmul.f32 %v846, %v846
    %v849 = vmul.f32 %v847, 2.0
    %v850 = vmul.f32 %v848, 2.0
    %851 = vst [vmem:[#allocation8] sm:$0xff] %v849
    %852 = vst [vmem:[#allocation8 + $0x8] sm:$0xff] %v850
    %v853 = vld [vmem:[%s2] sm:$0x1]
    %v855 = vlaneseq
    %v856 = vshrl.u32 %v855, 7
    %v857 = vsub.s32 0, %v856
    %v858 = vrot.slane %v853, %v857
    %v860 = vmul.f32 %v849, %v858
    %v861 = vmul.f32 %v850, %v858
    %v862 = vld [vmem:[#allocation2] sm:$0xff]
    %v863 = vld [vmem:[%s3] sm:$0xff]
    %vm864 = vcmask 130048
    %v866 = vsel %vm864, %v863, 0
    %868 = vmatprep.subr.mxu0 0.0
    %v869 = vand.u32 %v860, 4294901760
    %870 = vmatpush1.msra.mxu0 %v869
    %871 = vmatprep.subr.mxu0 0.0
    %v872 = vand.u32 %v861, 4294901760
    %873 = vmatpush1.msra.mxu0 %v872
    %874 = vmatprep.subr.mxu0 0.0
    %875 = vmatpush1.msra.mxu0 0.0
    %876 = vmatprep.subr.mxu0 0.0
    %877 = vmatpush1.msra.mxu0 0.0
    %878 = vmatprep.subr.mxu0 0.0
    %879 = vmatpush1.msra.mxu0 0.0
    %880 = vmatprep.subr.mxu0 0.0
    %881 = vmatpush1.msra.mxu0 0.0
    %882 = vmatprep.subr.mxu0 0.0
    %883 = vmatpush1.msra.mxu0 0.0
    %884 = vmatprep.subr.mxu0 0.0
    %885 = vmatpush1.msra.mxu0 0.0
    %886 = vmatprep.subr.mxu0 0.0
    %887 = vmatpush1.msra.mxu0 0.0
    %888 = vmatprep.subr.mxu0 0.0
    %889 = vmatpush1.msra.mxu0 0.0
    %890 = vmatprep.subr.mxu0 0.0
    %891 = vmatpush1.msra.mxu0 0.0
    %892 = vmatprep.subr.mxu0 0.0
    %893 = vmatpush1.msra.mxu0 0.0
    %894 = vmatprep.subr.mxu0 0.0
    %895 = vmatpush1.msra.mxu0 0.0
    %896 = vmatprep.subr.mxu0 0.0
    %897 = vmatpush1.msra.mxu0 0.0
    %898 = vmatprep.subr.mxu0 0.0
    %899 = vmatpush1.msra.mxu0 0.0
    %900 = vmatprep.subr.mxu0 0.0
    %901 = vmatpush1.msra.mxu0 0.0
    %902 = vmatprep.subr.mxu0 0.0
    %903 = vmatpush1.msra.mxu0 0.0
    %904 = vmatprep.subr.mxu0 0.0
    %905 = vmatpush1.msra.mxu0 0.0
    %906 = vmatprep.subr.mxu0 0.0
    %907 = vmatpush1.msra.mxu0 0.0
    %908 = vmatprep.subr.mxu0 0.0
    %909 = vmatpush1.msra.mxu0 0.0
    %910 = vmatprep.subr.mxu0 0.0
    %911 = vmatpush1.msra.mxu0 0.0
    %912 = vmatprep.subr.mxu0 0.0
    %913 = vmatpush1.msra.mxu0 0.0
    %914 = vmatprep.subr.mxu0 0.0
    %915 = vmatpush1.msra.mxu0 0.0
    %916 = vmatprep.subr.mxu0 0.0
    %917 = vmatpush1.msra.mxu0 0.0
    %918 = vmatprep.subr.mxu0 0.0
    %919 = vmatpush1.msra.mxu0 0.0
    %920 = vmatprep.subr.mxu0 0.0
    %921 = vmatpush1.msra.mxu0 0.0
    %922 = vmatprep.subr.mxu0 0.0
    %923 = vmatpush1.msra.mxu0 0.0
    %924 = vmatprep.subr.mxu0 0.0
    %925 = vmatpush1.msra.mxu0 0.0
    %926 = vmatprep.subr.mxu0 0.0
    %927 = vmatpush1.msra.mxu0 0.0
    %928 = vmatprep.subr.mxu0 0.0
    %929 = vmatpush1.msra.mxu0 0.0
    %930 = vmatprep.subr.mxu0 0.0
    %931 = vmatpush1.msra.mxu0 0.0
    %932 = vmatprep.subr.mxu0 0.0
    %933 = vmatpush1.msra.mxu0 0.0
    %934 = vmatprep.mubr.f32.mxu0 0.0
    %v935 = vand.u32 %v866, 4294901760
    %v936 = vsub.f32 %v866, %v935
    %v937 = vand.u32 %v936, 4294901760
    %v938 = vsub.f32 %v936, %v937
    %v939 = vand.u32 %v938, 4294901760
    %940 = vmatmul.mubr.f32.gmra.mrb[0].mxu0 %v939
    %v941 = vpop.f32.mrb[0].mxu0
    %v942 = vadd.f32 0.0, %v941
    %v943 = vpop.f32.mrb[0].mxu0
    %944 = vdwg.mxu0
    %945 = vmatprep.subr.mxu0 0.0
    %v946 = vand.u32 %v860, 4294901760
    %v947 = vsub.f32 %v860, %v946
    %v948 = vand.u32 %v947, 4294901760
    %v949 = vsub.f32 %v947, %v948
    %v950 = vand.u32 %v949, 4294901760
    %951 = vmatpush1.msra.mxu0 %v950
    %952 = vmatprep.subr.mxu0 0.0
    %v953 = vand.u32 %v861, 4294901760
    %v954 = vsub.f32 %v861, %v953
    %v955 = vand.u32 %v954, 4294901760
    %v956 = vsub.f32 %v954, %v955
    %v957 = vand.u32 %v956, 4294901760
    %958 = vmatpush1.msra.mxu0 %v957
    %959 = vmatprep.subr.mxu0 0.0
    %960 = vmatpush1.msra.mxu0 0.0
    %961 = vmatprep.subr.mxu0 0.0
    %962 = vmatpush1.msra.mxu0 0.0
    %963 = vmatprep.subr.mxu0 0.0
    %964 = vmatpush1.msra.mxu0 0.0
    %965 = vmatprep.subr.mxu0 0.0
    %966 = vmatpush1.msra.mxu0 0.0
    %967 = vmatprep.subr.mxu0 0.0
    %968 = vmatpush1.msra.mxu0 0.0
    %969 = vmatprep.subr.mxu0 0.0
    %970 = vmatpush1.msra.mxu0 0.0
    %971 = vmatprep.subr.mxu0 0.0
    %972 = vmatpush1.msra.mxu0 0.0
    %973 = vmatprep.subr.mxu0 0.0
    %974 = vmatpush1.msra.mxu0 0.0
    %975 = vmatprep.subr.mxu0 0.0
    %976 = vmatpush1.msra.mxu0 0.0
    %977 = vmatprep.subr.mxu0 0.0
    %978 = vmatpush1.msra.mxu0 0.0
    %979 = vmatprep.subr.mxu0 0.0
    %980 = vmatpush1.msra.mxu0 0.0
    %981 = vmatprep.subr.mxu0 0.0
    %982 = vmatpush1.msra.mxu0 0.0
    %983 = vmatprep.subr.mxu0 0.0
    %984 = vmatpush1.msra.mxu0 0.0
    %985 = vmatprep.subr.mxu0 0.0
    %986 = vmatpush1.msra.mxu0 0.0
    %987 = vmatprep.subr.mxu0 0.0
    %988 = vmatpush1.msra.mxu0 0.0
    %989 = vmatprep.subr.mxu0 0.0
    %990 = vmatpush1.msra.mxu0 0.0
    %991 = vmatprep.subr.mxu0 0.0
    %992 = vmatpush1.msra.mxu0 0.0
    %993 = vmatprep.subr.mxu0 0.0
    %994 = vmatpush1.msra.mxu0 0.0
    %995 = vmatprep.subr.mxu0 0.0
    %996 = vmatpush1.msra.mxu0 0.0
    %997 = vmatprep.subr.mxu0 0.0
    %998 = vmatpush1.msra.mxu0 0.0
    %999 = vmatprep.subr.mxu0 0.0
    %1000 = vmatpush1.msra.mxu0 0.0
    %1001 = vmatprep.subr.mxu0 0.0
    %1002 = vmatpush1.msra.mxu0 0.0
    %1003 = vmatprep.subr.mxu0 0.0
    %1004 = vmatpush1.msra.mxu0 0.0
    %1005 = vmatprep.subr.mxu0 0.0
    %1006 = vmatpush1.msra.mxu0 0.0
    %1007 = vmatprep.subr.mxu0 0.0
    %1008 = vmatpush1.msra.mxu0 0.0
    %1009 = vmatprep.subr.mxu0 0.0
    %1010 = vmatpush1.msra.mxu0 0.0
    %1011 = vmatprep.subr.mxu0 0.0
    %1012 = vmatpush1.msra.mxu0 0.0
    %1013 = vmatprep.subr.mxu0 0.0
    %1014 = vmatpush1.msra.mxu0 0.0
    %1015 = vmatprep.subr.mxu0 0.0
    %1016 = vmatpush1.msra.mxu0 0.0
    %1017 = vmatprep.subr.mxu0 0.0
    %1018 = vmatpush1.msra.mxu0 0.0
    %1019 = vmatprep.mubr.f32.mxu0 0.0
    %v1020 = vand.u32 %v866, 4294901760
    %1021 = vmatmul.mubr.f32.gmra.mrb[0].mxu0 %v1020
    %v1022 = vpop.f32.mrb[0].mxu0
    %v1023 = vadd.f32 %v942, %v1022
    %v1024 = vpop.f32.mrb[0].mxu0
    %1025 = vdwg.mxu0
    %1026 = vmatprep.subr.mxu0 0.0
    %v1027 = vand.u32 %v860, 4294901760
    %v1028 = vsub.f32 %v860, %v1027
    %1029 = vmatpush1.msra.mxu0 %v1028
    %1030 = vmatprep.subr.mxu0 0.0
    %v1031 = vand.u32 %v861, 4294901760
    %v1032 = vsub.f32 %v861, %v1031
    %1033 = vmatpush1.msra.mxu0 %v1032
    %1034 = vmatprep.subr.mxu0 0.0
    %1035 = vmatpush1.msra.mxu0 0.0
    %1036 = vmatprep.subr.mxu0 0.0
    %1037 = vmatpush1.msra.mxu0 0.0
    %1038 = vmatprep.subr.mxu0 0.0
    %1039 = vmatpush1.msra.mxu0 0.0
    %1040 = vmatprep.subr.mxu0 0.0
    %1041 = vmatpush1.msra.mxu0 0.0
    %1042 = vmatprep.subr.mxu0 0.0
    %1043 = vmatpush1.msra.mxu0 0.0
    %1044 = vmatprep.subr.mxu0 0.0
    %1045 = vmatpush1.msra.mxu0 0.0
    %1046 = vmatprep.subr.mxu0 0.0
    %1047 = vmatpush1.msra.mxu0 0.0
    %1048 = vmatprep.subr.mxu0 0.0
    %1049 = vmatpush1.msra.mxu0 0.0
    %1050 = vmatprep.subr.mxu0 0.0
    %1051 = vmatpush1.msra.mxu0 0.0
    %1052 = vmatprep.subr.mxu0 0.0
    %1053 = vmatpush1.msra.mxu0 0.0
    %1054 = vmatprep.subr.mxu0 0.0
    %1055 = vmatpush1.msra.mxu0 0.0
    %1056 = vmatprep.subr.mxu0 0.0
    %1057 = vmatpush1.msra.mxu0 0.0
    %1058 = vmatprep.subr.mxu0 0.0
    %1059 = vmatpush1.msra.mxu0 0.0
    %1060 = vmatprep.subr.mxu0 0.0
    %1061 = vmatpush1.msra.mxu0 0.0
    %1062 = vmatprep.subr.mxu0 0.0
    %1063 = vmatpush1.msra.mxu0 0.0
    %1064 = vmatprep.subr.mxu0 0.0
    %1065 = vmatpush1.msra.mxu0 0.0
    %1066 = vmatprep.subr.mxu0 0.0
    %1067 = vmatpush1.msra.mxu0 0.0
    %1068 = vmatprep.subr.mxu0 0.0
    %1069 = vmatpush1.msra.mxu0 0.0
    %1070 = vmatprep.subr.mxu0 0.0
    %1071 = vmatpush1.msra.mxu0 0.0
    %1072 = vmatprep.subr.mxu0 0.0
    %1073 = vmatpush1.msra.mxu0 0.0
    %1074 = vmatprep.subr.mxu0 0.0
    %1075 = vmatpush1.msra.mxu0 0.0
    %1076 = vmatprep.subr.mxu0 0.0
    %1077 = vmatpush1.msra.mxu0 0.0
    %1078 = vmatprep.subr.mxu0 0.0
    %1079 = vmatpush1.msra.mxu0 0.0
    %1080 = vmatprep.subr.mxu0 0.0
    %1081 = vmatpush1.msra.mxu0 0.0
    %1082 = vmatprep.subr.mxu0 0.0
    %1083 = vmatpush1.msra.mxu0 0.0
    %1084 = vmatprep.subr.mxu0 0.0
    %1085 = vmatpush1.msra.mxu0 0.0
    %1086 = vmatprep.subr.mxu0 0.0
    %1087 = vmatpush1.msra.mxu0 0.0
    %1088 = vmatprep.subr.mxu0 0.0
    %1089 = vmatpush1.msra.mxu0 0.0
    %1090 = vmatprep.subr.mxu0 0.0
    %1091 = vmatpush1.msra.mxu0 0.0
    %1092 = vmatprep.subr.mxu0 0.0
    %1093 = vmatpush1.msra.mxu0 0.0
    %1094 = vmatprep.mubr.f32.mxu0 0.0
    %v1095 = vand.u32 %v866, 4294901760
    %v1096 = vsub.f32 %v866, %v1095
    %1097 = vmatmul.mubr.f32.gmra.mrb[0].mxu0 %v1096
    %v1098 = vpop.f32.mrb[0].mxu0
    %v1099 = vadd.f32 %v1023, %v1098
    %v1100 = vpop.f32.mrb[0].mxu0
    %1101 = vdwg.mxu0
    %1102 = vmatprep.subr.mxu0 0.0
    %v1103 = vand.u32 %v860, 4294901760
    %1104 = vmatpush1.msra.mxu0 %v1103
    %1105 = vmatprep.subr.mxu0 0.0
    %v1106 = vand.u32 %v861, 4294901760
    %1107 = vmatpush1.msra.mxu0 %v1106
    %1108 = vmatprep.subr.mxu0 0.0
    %1109 = vmatpush1.msra.mxu0 0.0
    %1110 = vmatprep.subr.mxu0 0.0
    %1111 = vmatpush1.msra.mxu0 0.0
    %1112 = vmatprep.subr.mxu0 0.0
    %1113 = vmatpush1.msra.mxu0 0.0
    %1114 = vmatprep.subr.mxu0 0.0
    %1115 = vmatpush1.msra.mxu0 0.0
    %1116 = vmatprep.subr.mxu0 0.0
    %1117 = vmatpush1.msra.mxu0 0.0
    %1118 = vmatprep.subr.mxu0 0.0
    %1119 = vmatpush1.msra.mxu0 0.0
    %1120 = vmatprep.subr.mxu0 0.0
    %1121 = vmatpush1.msra.mxu0 0.0
    %1122 = vmatprep.subr.mxu0 0.0
    %1123 = vmatpush1.msra.mxu0 0.0
    %1124 = vmatprep.subr.mxu0 0.0
    %1125 = vmatpush1.msra.mxu0 0.0
    %1126 = vmatprep.subr.mxu0 0.0
    %1127 = vmatpush1.msra.mxu0 0.0
    %1128 = vmatprep.subr.mxu0 0.0
    %1129 = vmatpush1.msra.mxu0 0.0
    %1130 = vmatprep.subr.mxu0 0.0
    %1131 = vmatpush1.msra.mxu0 0.0
    %1132 = vmatprep.subr.mxu0 0.0
    %1133 = vmatpush1.msra.mxu0 0.0
    %1134 = vmatprep.subr.mxu0 0.0
    %1135 = vmatpush1.msra.mxu0 0.0
    %1136 = vmatprep.subr.mxu0 0.0
    %1137 = vmatpush1.msra.mxu0 0.0
    %1138 = vmatprep.subr.mxu0 0.0
    %1139 = vmatpush1.msra.mxu0 0.0
    %1140 = vmatprep.subr.mxu0 0.0
    %1141 = vmatpush1.msra.mxu0 0.0
    %1142 = vmatprep.subr.mxu0 0.0
    %1143 = vmatpush1.msra.mxu0 0.0
    %1144 = vmatprep.subr.mxu0 0.0
    %1145 = vmatpush1.msra.mxu0 0.0
    %1146 = vmatprep.subr.mxu0 0.0
    %1147 = vmatpush1.msra.mxu0 0.0
    %1148 = vmatprep.subr.mxu0 0.0
    %1149 = vmatpush1.msra.mxu0 0.0
    %1150 = vmatprep.subr.mxu0 0.0
    %1151 = vmatpush1.msra.mxu0 0.0
    %1152 = vmatprep.subr.mxu0 0.0
    %1153 = vmatpush1.msra.mxu0 0.0
    %1154 = vmatprep.subr.mxu0 0.0
    %1155 = vmatpush1.msra.mxu0 0.0
    %1156 = vmatprep.subr.mxu0 0.0
    %1157 = vmatpush1.msra.mxu0 0.0
    %1158 = vmatprep.subr.mxu0 0.0
    %1159 = vmatpush1.msra.mxu0 0.0
    %1160 = vmatprep.subr.mxu0 0.0
    %1161 = vmatpush1.msra.mxu0 0.0
    %1162 = vmatprep.subr.mxu0 0.0
    %1163 = vmatpush1.msra.mxu0 0.0
    %1164 = vmatprep.subr.mxu0 0.0
    %1165 = vmatpush1.msra.mxu0 0.0
    %1166 = vmatprep.subr.mxu0 0.0
    %1167 = vmatpush1.msra.mxu0 0.0
    %1168 = vmatprep.mubr.f32.mxu0 0.0
    %v1169 = vand.u32 %v866, 4294901760
    %v1170 = vsub.f32 %v866, %v1169
    %v1171 = vand.u32 %v1170, 4294901760
    %1172 = vmatmul.mubr.f32.gmra.mrb[0].mxu0 %v1171
    %v1173 = vpop.f32.mrb[0].mxu0
    %v1174 = vadd.f32 %v1099, %v1173
    %v1175 = vpop.f32.mrb[0].mxu0
    %1176 = vdwg.mxu0
    %1177 = vmatprep.subr.mxu0 0.0
    %v1178 = vand.u32 %v860, 4294901760
    %v1179 = vsub.f32 %v860, %v1178
    %v1180 = vand.u32 %v1179, 4294901760
    %1181 = vmatpush1.msra.mxu0 %v1180
    %1182 = vmatprep.subr.mxu0 0.0
    %v1183 = vand.u32 %v861, 4294901760
    %v1184 = vsub.f32 %v861, %v1183
    %v1185 = vand.u32 %v1184, 4294901760
    %1186 = vmatpush1.msra.mxu0 %v1185
    %1187 = vmatprep.subr.mxu0 0.0
    %1188 = vmatpush1.msra.mxu0 0.0
    %1189 = vmatprep.subr.mxu0 0.0
    %1190 = vmatpush1.msra.mxu0 0.0
    %1191 = vmatprep.subr.mxu0 0.0
    %1192 = vmatpush1.msra.mxu0 0.0
    %1193 = vmatprep.subr.mxu0 0.0
    %1194 = vmatpush1.msra.mxu0 0.0
    %1195 = vmatprep.subr.mxu0 0.0
    %1196 = vmatpush1.msra.mxu0 0.0
    %1197 = vmatprep.subr.mxu0 0.0
    %1198 = vmatpush1.msra.mxu0 0.0
    %1199 = vmatprep.subr.mxu0 0.0
    %1200 = vmatpush1.msra.mxu0 0.0
    %1201 = vmatprep.subr.mxu0 0.0
    %1202 = vmatpush1.msra.mxu0 0.0
    %1203 = vmatprep.subr.mxu0 0.0
    %1204 = vmatpush1.msra.mxu0 0.0
    %1205 = vmatprep.subr.mxu0 0.0
    %1206 = vmatpush1.msra.mxu0 0.0
    %1207 = vmatprep.subr.mxu0 0.0
    %1208 = vmatpush1.msra.mxu0 0.0
    %1209 = vmatprep.subr.mxu0 0.0
    %1210 = vmatpush1.msra.mxu0 0.0
    %1211 = vmatprep.subr.mxu0 0.0
    %1212 = vmatpush1.msra.mxu0 0.0
    %1213 = vmatprep.subr.mxu0 0.0
    %1214 = vmatpush1.msra.mxu0 0.0
    %1215 = vmatprep.subr.mxu0 0.0
    %1216 = vmatpush1.msra.mxu0 0.0
    %1217 = vmatprep.subr.mxu0 0.0
    %1218 = vmatpush1.msra.mxu0 0.0
    %1219 = vmatprep.subr.mxu0 0.0
    %1220 = vmatpush1.msra.mxu0 0.0
    %1221 = vmatprep.subr.mxu0 0.0
    %1222 = vmatpush1.msra.mxu0 0.0
    %1223 = vmatprep.subr.mxu0 0.0
    %1224 = vmatpush1.msra.mxu0 0.0
    %1225 = vmatprep.subr.mxu0 0.0
    %1226 = vmatpush1.msra.mxu0 0.0
    %1227 = vmatprep.subr.mxu0 0.0
    %1228 = vmatpush1.msra.mxu0 0.0
    %1229 = vmatprep.subr.mxu0 0.0
    %1230 = vmatpush1.msra.mxu0 0.0
    %1231 = vmatprep.subr.mxu0 0.0
    %1232 = vmatpush1.msra.mxu0 0.0
    %1233 = vmatprep.subr.mxu0 0.0
    %1234 = vmatpush1.msra.mxu0 0.0
    %1235 = vmatprep.subr.mxu0 0.0
    %1236 = vmatpush1.msra.mxu0 0.0
    %1237 = vmatprep.subr.mxu0 0.0
    %1238 = vmatpush1.msra.mxu0 0.0
    %1239 = vmatprep.subr.mxu0 0.0
    %1240 = vmatpush1.msra.mxu0 0.0
    %1241 = vmatprep.subr.mxu0 0.0
    %1242 = vmatpush1.msra.mxu0 0.0
    %1243 = vmatprep.subr.mxu0 0.0
    %1244 = vmatpush1.msra.mxu0 0.0
    %1245 = vmatprep.subr.mxu0 0.0
    %1246 = vmatpush1.msra.mxu0 0.0
    %1247 = vmatprep.mubr.f32.mxu0 0.0
    %v1248 = vand.u32 %v866, 4294901760
    %1249 = vmatmul.mubr.f32.gmra.mrb[0].mxu0 %v1248
    %v1250 = vpop.f32.mrb[0].mxu0
    %v1251 = vadd.f32 %v1174, %v1250
    %v1252 = vpop.f32.mrb[0].mxu0
    %1253 = vdwg.mxu0
    %1254 = vmatprep.subr.mxu0 0.0
    %v1255 = vand.u32 %v860, 4294901760
    %1256 = vmatpush1.msra.mxu0 %v1255
    %1257 = vmatprep.subr.mxu0 0.0
    %v1258 = vand.u32 %v861, 4294901760
    %1259 = vmatpush1.msra.mxu0 %v1258
    %1260 = vmatprep.subr.mxu0 0.0
    %1261 = vmatpush1.msra.mxu0 0.0
    %1262 = vmatprep.subr.mxu0 0.0
    %1263 = vmatpush1.msra.mxu0 0.0
    %1264 = vmatprep.subr.mxu0 0.0
    %1265 = vmatpush1.msra.mxu0 0.0
    %1266 = vmatprep.subr.mxu0 0.0
    %1267 = vmatpush1.msra.mxu0 0.0
    %1268 = vmatprep.subr.mxu0 0.0
    %1269 = vmatpush1.msra.mxu0 0.0
    %1270 = vmatprep.subr.mxu0 0.0
    %1271 = vmatpush1.msra.mxu0 0.0
    %1272 = vmatprep.subr.mxu0 0.0
    %1273 = vmatpush1.msra.mxu0 0.0
    %1274 = vmatprep.subr.mxu0 0.0
    %1275 = vmatpush1.msra.mxu0 0.0
    %1276 = vmatprep.subr.mxu0 0.0
    %1277 = vmatpush1.msra.mxu0 0.0
    %1278 = vmatprep.subr.mxu0 0.0
    %1279 = vmatpush1.msra.mxu0 0.0
    %1280 = vmatprep.subr.mxu0 0.0
    %1281 = vmatpush1.msra.mxu0 0.0
    %1282 = vmatprep.subr.mxu0 0.0
    %1283 = vmatpush1.msra.mxu0 0.0
    %1284 = vmatprep.subr.mxu0 0.0
    %1285 = vmatpush1.msra.mxu0 0.0
    %1286 = vmatprep.subr.mxu0 0.0
    %1287 = vmatpush1.msra.mxu0 0.0
    %1288 = vmatprep.subr.mxu0 0.0
    %1289 = vmatpush1.msra.mxu0 0.0
    %1290 = vmatprep.subr.mxu0 0.0
    %1291 = vmatpush1.msra.mxu0 0.0
    %1292 = vmatprep.subr.mxu0 0.0
    %1293 = vmatpush1.msra.mxu0 0.0
    %1294 = vmatprep.subr.mxu0 0.0
    %1295 = vmatpush1.msra.mxu0 0.0
    %1296 = vmatprep.subr.mxu0 0.0
    %1297 = vmatpush1.msra.mxu0 0.0
    %1298 = vmatprep.subr.mxu0 0.0
    %1299 = vmatpush1.msra.mxu0 0.0
    %1300 = vmatprep.subr.mxu0 0.0
    %1301 = vmatpush1.msra.mxu0 0.0
    %1302 = vmatprep.subr.mxu0 0.0
    %1303 = vmatpush1.msra.mxu0 0.0
    %1304 = vmatprep.subr.mxu0 0.0
    %1305 = vmatpush1.msra.mxu0 0.0
    %1306 = vmatprep.subr.mxu0 0.0
    %1307 = vmatpush1.msra.mxu0 0.0
    %1308 = vmatprep.subr.mxu0 0.0
    %1309 = vmatpush1.msra.mxu0 0.0
    %1310 = vmatprep.subr.mxu0 0.0
    %1311 = vmatpush1.msra.mxu0 0.0
    %1312 = vmatprep.subr.mxu0 0.0
    %1313 = vmatpush1.msra.mxu0 0.0
    %1314 = vmatprep.subr.mxu0 0.0
    %1315 = vmatpush1.msra.mxu0 0.0
    %1316 = vmatprep.subr.mxu0 0.0
    %1317 = vmatpush1.msra.mxu0 0.0
    %1318 = vmatprep.subr.mxu0 0.0
    %1319 = vmatpush1.msra.mxu0 0.0
    %1320 = vmatprep.mubr.f32.mxu0 0.0
    %v1321 = vand.u32 %v866, 4294901760
    %1322 = vmatmul.mubr.f32.gmra.mrb[0].mxu0 %v1321
    %v1323 = vpop.f32.mrb[0].mxu0
    %v1324 = vadd.f32 %v1251, %v1323
    %v1325 = vpop.f32.mrb[0].mxu0
    %1326 = vdwg.mxu0
    %v1327 = vadd.f32 %v862, %v1324
    %1328 = vst [vmem:[#allocation2] sm:$0xff] %v1327
    // Predicated region
    $region30: #{tpu_custom_call.1} parent=1 // pred_check
      %p1329 = pneg %p48
    $region31: #{tpu_custom_call.1} parent=1 // pred_check_branch
      %1331 = sbr.rel (%p1329) target = $region33
    $region32: #{tpu_custom_call.1} parent=1 // pred_region
      %v1332 = vld [vmem:[#allocation2] sm:$0xff]
      %1333 = vadd.xlane.f32.xlu0 %v1332
      %v1334 = vpop.xlane.xlu0 %1333
      %vm1335 = vcmask 7168
      %1336 = vst.msk [vmem:[%s5] sm:$0xff] %vm1335, %v1334
    $region33: #{tpu_custom_call.1} parent=1 // pred_fallthru
      _
    // Predicated region
    $region34: #{tpu_custom_call.1} parent=1 // pred_check
      _
    $region35: #{tpu_custom_call.1} parent=1 // pred_check_branch
      %1338 = sbr.rel (0) target = $region37
    $region36: #{tpu_custom_call.1} parent=1 // pred_region
      %s1340 = ssub.s32 256, 256
      %1341 = vsyncadd [#allocation5], %s1340
      %s1342 = sshll.u32 [#allocation8], 4
      %s1343 = int_to_ptr.vmem [resolvable:$true] %s1342
      %1348 = dma.vmem_to_hbm [thread:$0]  %s1343, 256, %s4, [#allocation5], 128, 128, 8
    $region37: #{tpu_custom_call.1} parent=1 // pred_fallthru
      _
    // Predicated region
    $region38: #{tpu_custom_call.1} parent=1 // pred_check
      _
    $region39: #{tpu_custom_call.1} parent=1 // pred_check_branch
      %1350 = sbr.rel (0) target = $region41
    $region40: #{tpu_custom_call.1} parent=1 // pred_region
      _
    $region41: #{tpu_custom_call.1} parent=1 // pred_fallthru
      _
    // Predicated region
    $region42: #{tpu_custom_call.1} parent=1 // pred_check
      _
    $region43: #{tpu_custom_call.1} parent=1 // pred_check_branch
      %1352 = sbr.rel (0) target = $region45
    $region44: #{tpu_custom_call.1} parent=1 // pred_region
      %1353 = dma.done [#allocation5], 256
    $region45: #{tpu_custom_call.1} parent=1 // pred_fallthru
      _
    // Predicated region
    $region46: #{tpu_custom_call.1} parent=1 // pred_check
      _
    $region47: #{tpu_custom_call.1} parent=1 // pred_check_branch
      %1355 = sbr.rel (0) target = $region49
    $region48: #{tpu_custom_call.1} parent=1 // pred_region
      _
    $region49: #{tpu_custom_call.1} parent=1 // pred_fallthru
      _
    %1356 = vsyncpa [#allocation4], 1
    %1357 = vsyncpa [#allocation7], 1
    %1358 = vsyncpa [#allocation5], 1

</llo_original>
